<compile_context>
chip_gen: v7x
topology: tpu7x:2x2x1
jax: 0.10.0
libtpu: 0.0.40
codegen_flags: <defaults>
</compile_context>

<pallas_src>
import functools

import jax
import jax.numpy as jnp
from jax.experimental import pallas as pl
from jax.experimental.pallas import tpu as pltpu


def _roll_lanes(x, s):
    """out[:, p] = x[:, (p + s) mod L]  (s is a static Python int; uses the XLU rotate)."""
    L = x.shape[-1]
    shift = (-s) % L
    if shift == 0:
        return x
    return pltpu.roll(x, shift, 1)


def res_conv_block_kernel(x_ref, w1_ref, w2_ref, w3_ref, bp_ref, o_ref, *, H, W, Cout):
    """One grid step: NB batch elements folded along lanes, all three layers fused.

    x_ref : (Cin_pad, NB*H*W)          o_ref : (3*Cout, NB*H*W)
    w*_ref: (3, Cout, 3*C_layer)       leading axis = ky, columns ordered (kx, cin)
    bp_ref: (Cout, 8)                  columns = [b1, a1, b2, a2, b3, a3, 0, 0]
    """
    HW = H * W
    L = x_ref.shape[-1]

    # ---- hoisted full-shape edge masks (built once per channel width) ----------------
    mask_cache = {}

    def edge_masks(C):
        if C not in mask_cache:
            pix = jax.lax.broadcasted_iota(jnp.int32, (C, L), 1) % HW  # local pixel id
            col = pix % W
            mask_cache[C] = (
                pix >= W,              # row y-1 exists  (dy = -1 taps)
                pix < (H - 1) * W,     # row y+1 exists  (dy = +1 taps)
                col >= 1,              # col x-1 exists  (dx = -1 taps)
                col <= W - 2,          # col x+1 exists  (dx = +1 taps)
            )
        return mask_cache[C]

    def conv3x3_prelu(x, w_ref, bias, alpha):
        """3x3 'same' conv + bias + per-channel PReLU in channel-major flat layout."""
        C = x.shape[0]
        row_up, row_dn, col_m, col_p = edge_masks(C)
        acc = None
        for ky in range(3):                    # per-ky accumulation: K = 3*C per matmul
            dy = ky - 1
            if dy == 0:
                xd = x
            else:
                xd = _roll_lanes(x, dy * W)    # circular row shift; edges masked below
                xd = jnp.where(row_up if dy < 0 else row_dn, xd, 0.0)
            taps = []
            for kx in range(3):
                dx = kx - 1
                if dx == 0:
                    t = xd
                else:
                    t = _roll_lanes(xd, dx)    # circular column shift
                    t = jnp.where(col_m if dx < 0 else col_p, t, 0.0)
                taps.append(t)
            patches = jnp.concatenate(taps, axis=0)              # (3*C, L) tile-aligned
            part = jnp.dot(w_ref[ky], patches,
                           preferred_element_type=jnp.float32)   # (Cout, L)
            acc = part if acc is None else acc + part
        y = acc + bias
        return jnp.where(y >= 0.0, y, alpha * y)                 # PReLU (per out channel)

    bp = bp_ref[...]
    x = x_ref[...].astype(jnp.float32)

    # Write each output slab as soon as it is ready so stores overlap later compute.
    ya = conv3x3_prelu(x, w1_ref, bp[:, 0:1], bp[:, 1:2])
    o_ref[0:Cout, :] = ya.astype(o_ref.dtype)
    yb = conv3x3_prelu(ya, w2_ref, bp[:, 2:3], bp[:, 3:4])
    o_ref[Cout:2 * Cout, :] = yb.astype(o_ref.dtype)
    yc = conv3x3_prelu(yb, w3_ref, bp[:, 4:5], bp[:, 5:6])
    o_ref[2 * Cout:3 * Cout, :] = yc.astype(o_ref.dtype)


def _num_tensorcores():
    """Best-effort TensorCores per chip (2 on megacore chips: v4, v7x; else 1)."""
    try:
        kind = jax.devices()[0].device_kind.lower()
    except Exception:
        return 1
    return 2 if ("v7" in kind or "tpu7" in kind or "v4" in kind) else 1


def _pack_weights(w_oihw, c_in_pad):
    """OIHW (Cout, Cin, 3, 3) -> (3, Cout, 3*c_in_pad): per-ky slabs, columns (kx, cin)."""
    c_out, c_in = w_oihw.shape[0], w_oihw.shape[1]
    if c_in_pad > c_in:
        w_oihw = jnp.pad(w_oihw, ((0, 0), (0, c_in_pad - c_in), (0, 0), (0, 0)))
    return jnp.transpose(w_oihw, (2, 0, 3, 1)).reshape(3, c_out, 3 * c_in_pad)


def res_conv_block(x_nchw, layers, num_groups=None):
    """ResConvBlock.forward (BN=False).  layers[name] = (w_oihw, bias, prelu_alpha)."""
    N, Cin, H, W = x_nchw.shape
    w1_oihw, b1, p1 = layers["a"]
    w2_oihw, b2, p2 = layers["b"]
    w3_oihw, b3, p3 = layers["c"]
    Cout = w1_oihw.shape[0]
    HW = H * W
    Cin_pad = ((Cin + 7) // 8) * 8            # sublane-align layer-1 input channels

    w1 = _pack_weights(w1_oihw, Cin_pad)
    w2 = _pack_weights(w2_oihw, Cout)
    w3 = _pack_weights(w3_oihw, Cout)
    zeros = jnp.zeros((Cout,), jnp.float32)
    bp = jnp.stack([b1, p1, b2, p2, b3, p3, zeros, zeros], axis=1)    # (Cout, 8)

    # Channel-major layout with the batch folded along the flat lane axis:
    # (N, Cin, H, W) -> (Cin_pad, N*H*W), element n occupying lanes [n*HW, (n+1)*HW).
    x_flat = x_nchw.reshape(N, Cin, HW)
    x_flat = jnp.pad(x_flat, ((0, 0), (0, Cin_pad - Cin), (0, 0)))
    x_fold = jnp.transpose(x_flat, (1, 0, 2)).reshape(Cin_pad, N * HW)

    # One grid step per TensorCore (v7x/v4: 2, marked "parallel"); single-TC chips fold
    # the whole batch into one step (no per-step overhead, wider MXU RHS).
    groups = _num_tensorcores() if num_groups is None else num_groups
    if groups < 1 or N % groups != 0:
        groups = 1
    L = (N // groups) * HW

    kernel = functools.partial(res_conv_block_kernel, H=H, W=W, Cout=Cout)

    out = pl.pallas_call(
        kernel,
        out_shape=jax.ShapeDtypeStruct((3 * Cout, N * HW), x_nchw.dtype),
        grid=(groups,),
        in_specs=[
            pl.BlockSpec((Cin_pad, L), lambda g: (0, g)),
            pl.BlockSpec((3, Cout, 3 * Cin_pad), lambda g: (0, 0, 0)),
            pl.BlockSpec((3, Cout, 3 * Cout), lambda g: (0, 0, 0)),
            pl.BlockSpec((3, Cout, 3 * Cout), lambda g: (0, 0, 0)),
            pl.BlockSpec((Cout, 8), lambda g: (0, 0)),
        ],
        out_specs=pl.BlockSpec((3 * Cout, L), lambda g: (0, g)),
        compiler_params=pltpu.CompilerParams(dimension_semantics=("parallel",)),
    )(x_fold, w1, w2, w3, bp)

    out = out.reshape(3 * Cout, N, HW)
    return jnp.transpose(out, (1, 0, 2)).reshape(N, 3 * Cout, H, W)


# ---------------------------------------------------------------------------
# Parameter construction + pure-JAX reference
# ---------------------------------------------------------------------------

def init_layer(key, c_in, c_out):
    """Deterministic synthetic params in PyTorch (OIHW) layout."""
    kw, kb = jax.random.split(key)
    w_oihw = 0.1 * jax.random.normal(kw, (c_out, c_in, 3, 3), jnp.float32)
    bias = 0.05 * jax.random.normal(kb, (c_out,), jnp.float32)
    alpha = jnp.full((c_out,), 0.25, jnp.float32)   # PyTorch PReLU default
    return w_oihw, bias, alpha


def ref_res_conv_block(x_nchw, layers):
    def layer(x, w_oihw, bias, alpha):
        y = jax.lax.conv_general_dilated(
            x, w_oihw, window_strides=(1, 1), padding=((1, 1), (1, 1)),
            dimension_numbers=("NCHW", "OIHW", "NCHW"),
            precision=jax.lax.Precision.HIGHEST)
        y = y + bias[None, :, None, None]
        return jnp.where(y >= 0, y, alpha[None, :, None, None] * y)

    a = layer(x_nchw, *layers["a"])
    b = layer(a, *layers["b"])
    c = layer(b, *layers["c"])
    return jnp.concatenate([a, b, c], axis=1)


if __name__ == "__main__":
    N, In_D, Out_D, H, W = 2, 4, 8, 16, 16

    key = jax.random.PRNGKey(0)
    kx, ka, kb, kc = jax.random.split(key, 4)
    x = jax.random.normal(kx, (N, In_D, H, W), jnp.float32)

    layers = {
        "a": init_layer(ka, In_D, Out_D),
        "b": init_layer(kb, Out_D, Out_D),
        "c": init_layer(kc, Out_D, Out_D),
    }

    out = jax.block_until_ready(jax.jit(res_conv_block)(x, layers))
    assert out.shape == (N, 3 * Out_D, H, W), out.shape

    ref = jax.block_until_ready(ref_res_conv_block(x, layers))
    max_err = float(jnp.max(jnp.abs(out - ref)))
    assert jnp.allclose(out, ref, atol=1e-4, rtol=1e-4), f"mismatch vs reference, max_err={max_err}"

    print("KERNEL_OK")
</pallas_src>

<mosaic_0001>
module attributes {stable_mosaic.version = 11 : i64} {
  func.func @res_conv_block_kernel(%arg0: i32, %arg1: memref<8x512xf32, #tpu.memory_space<vmem>>, %arg2: memref<3x8x24xf32, #tpu.memory_space<vmem>>, %arg3: memref<3x8x24xf32, #tpu.memory_space<vmem>>, %arg4: memref<3x8x24xf32, #tpu.memory_space<vmem>>, %arg5: memref<8x8xf32, #tpu.memory_space<vmem>>, %arg6: memref<24x512xf32, #tpu.memory_space<vmem>>) attributes {dimension_semantics = [#tpu.dimension_semantics<parallel>], iteration_bounds = array<i64: 1>, scalar_prefetch = 0 : i64, scratch_operands = 0 : i64, tpu.core_type = #tpu.core_type<tc>, window_params = [{transform_indices = @transform_0, window_bounds = array<i64: 8, 512>}, {pipeline_mode = #tpu.pipeline_mode<synchronous>, transform_indices = @transform_1, window_bounds = array<i64: 3, 8, 24>}, {pipeline_mode = #tpu.pipeline_mode<synchronous>, transform_indices = @transform_2, window_bounds = array<i64: 3, 8, 24>}, {pipeline_mode = #tpu.pipeline_mode<synchronous>, transform_indices = @transform_3, window_bounds = array<i64: 3, 8, 24>}, {pipeline_mode = #tpu.pipeline_mode<synchronous>, transform_indices = @transform_4, window_bounds = array<i64: 8, 8>}, {transform_indices = @transform_5, window_bounds = array<i64: 24, 512>}]} {
    %c0 = arith.constant 0 : index
    %c0_0 = arith.constant 0 : index
    %0 = vector.load %arg5[%c0, %c0_0] : memref<8x8xf32, #tpu.memory_space<vmem>>, vector<8x8xf32>
    %c0_1 = arith.constant 0 : index
    %c0_2 = arith.constant 0 : index
    %1 = vector.load %arg1[%c0_1, %c0_2] : memref<8x512xf32, #tpu.memory_space<vmem>>, vector<8x512xf32>
    %2 = vector.extract_strided_slice %0 {offsets = [0, 0], sizes = [8, 1], strides = [1, 1]} : vector<8x8xf32> to vector<8x1xf32>
    %3 = vector.extract_strided_slice %0 {offsets = [0, 1], sizes = [8, 1], strides = [1, 1]} : vector<8x8xf32> to vector<8x1xf32>
    %4 = tpu.iota {dimensions = array<i32: 1>} : vector<8x512xi32>
    %c256_i32 = arith.constant 256 : i32
    %c0_i32 = arith.constant 0 : i32
    %5 = arith.cmpi eq, %c256_i32, %c0_i32 : i32
    %c1_i32 = arith.constant 1 : i32
    %6 = arith.select %5, %c1_i32, %c256_i32 : i32
    %7 = vector.broadcast %6 : i32 to vector<8x512xi32>
    %8 = arith.remsi %4, %7 : vector<8x512xi32>
    %c0_i32_3 = arith.constant 0 : i32
    %9 = vector.broadcast %c0_i32_3 : i32 to vector<8x512xi32>
    %10 = arith.cmpi ne, %8, %9 : vector<8x512xi32>
    %c0_i32_4 = arith.constant 0 : i32
    %11 = vector.broadcast %c0_i32_4 : i32 to vector<8x512xi32>
    %12 = arith.cmpi slt, %8, %11 : vector<8x512xi32>
    %c0_i32_5 = arith.constant 0 : i32
    %13 = arith.cmpi slt, %6, %c0_i32_5 : i32
    %14 = vector.broadcast %13 : i1 to vector<8x512xi1>
    %15 = vector.broadcast %14 : vector<8x512xi1> to vector<8x512xi1>
    %16 = arith.xori %12, %15 : vector<8x512xi1>
    %17 = arith.andi %16, %10 : vector<8x512xi1>
    %18 = vector.broadcast %6 : i32 to vector<8x512xi32>
    %19 = arith.addi %8, %18 : vector<8x512xi32>
    %20 = arith.select %17, %19, %8 : vector<8x512xi1>, vector<8x512xi32>
    %c16_i32 = arith.constant 16 : i32
    %c0_i32_6 = arith.constant 0 : i32
    %21 = arith.cmpi eq, %c16_i32, %c0_i32_6 : i32
    %c1_i32_7 = arith.constant 1 : i32
    %22 = arith.select %21, %c1_i32_7, %c16_i32 : i32
    %23 = vector.broadcast %22 : i32 to vector<8x512xi32>
    %24 = arith.remsi %20, %23 : vector<8x512xi32>
    %c0_i32_8 = arith.constant 0 : i32
    %25 = vector.broadcast %c0_i32_8 : i32 to vector<8x512xi32>
    %26 = arith.cmpi ne, %24, %25 : vector<8x512xi32>
    %c0_i32_9 = arith.constant 0 : i32
    %27 = vector.broadcast %c0_i32_9 : i32 to vector<8x512xi32>
    %28 = arith.cmpi slt, %24, %27 : vector<8x512xi32>
    %c0_i32_10 = arith.constant 0 : i32
    %29 = arith.cmpi slt, %22, %c0_i32_10 : i32
    %30 = vector.broadcast %29 : i1 to vector<8x512xi1>
    %31 = vector.broadcast %30 : vector<8x512xi1> to vector<8x512xi1>
    %32 = arith.xori %28, %31 : vector<8x512xi1>
    %33 = arith.andi %32, %26 : vector<8x512xi1>
    %34 = vector.broadcast %22 : i32 to vector<8x512xi32>
    %35 = arith.addi %24, %34 : vector<8x512xi32>
    %36 = arith.select %33, %35, %24 : vector<8x512xi1>, vector<8x512xi32>
    %c16_i32_11 = arith.constant 16 : i32
    %37 = vector.broadcast %c16_i32_11 : i32 to vector<8x512xi32>
    %38 = arith.cmpi sge, %20, %37 : vector<8x512xi32>
    %c240_i32 = arith.constant 240 : i32
    %39 = vector.broadcast %c240_i32 : i32 to vector<8x512xi32>
    %40 = arith.cmpi slt, %20, %39 : vector<8x512xi32>
    %c1_i32_12 = arith.constant 1 : i32
    %41 = vector.broadcast %c1_i32_12 : i32 to vector<8x512xi32>
    %42 = arith.cmpi sge, %36, %41 : vector<8x512xi32>
    %c14_i32 = arith.constant 14 : i32
    %43 = vector.broadcast %c14_i32 : i32 to vector<8x512xi32>
    %44 = arith.cmpi sle, %36, %43 : vector<8x512xi32>
    %c16_i32_13 = arith.constant 16 : i32
    %45 = tpu.dynamic_rotate %1 by %c16_i32_13 dim 1 : vector<8x512xf32>, i32 -> vector<8x512xf32>
    %cst = arith.constant 0.000000e+00 : f32
    %46 = vector.broadcast %cst : f32 to vector<8x512xf32>
    %47 = arith.select %38, %45, %46 : vector<8x512xi1>, vector<8x512xf32>
    %c1_i32_14 = arith.constant 1 : i32
    %48 = tpu.dynamic_rotate %47 by %c1_i32_14 dim 1 : vector<8x512xf32>, i32 -> vector<8x512xf32>
    %cst_15 = arith.constant 0.000000e+00 : f32
    %49 = vector.broadcast %cst_15 : f32 to vector<8x512xf32>
    %50 = arith.select %42, %48, %49 : vector<8x512xi1>, vector<8x512xf32>
    %c511_i32 = arith.constant 511 : i32
    %51 = tpu.dynamic_rotate %47 by %c511_i32 dim 1 : vector<8x512xf32>, i32 -> vector<8x512xf32>
    %cst_16 = arith.constant 0.000000e+00 : f32
    %52 = vector.broadcast %cst_16 : f32 to vector<8x512xf32>
    %53 = arith.select %44, %51, %52 : vector<8x512xi1>, vector<8x512xf32>
    %54 = tpu.concatenate %50, %47, %53 in 0 : vector<8x512xf32>, vector<8x512xf32>, vector<8x512xf32> -> vector<24x512xf32>
    %c0_17 = arith.constant 0 : index
    %c0_18 = arith.constant 0 : index
    %c0_19 = arith.constant 0 : index
    %55 = vector.load %arg2[%c0_17, %c0_18, %c0_19] : memref<3x8x24xf32, #tpu.memory_space<vmem>>, vector<1x8x24xf32>
    %56 = vector.shape_cast %55 : vector<1x8x24xf32> to vector<8x24xf32>
    %cst_20 = arith.constant dense<0.000000e+00> : vector<8x512xf32>
    %57 = tpu.matmul %56, %54, %cst_20 {dimension_numbers = #tpu.dot_dimension_numbers<[1], [0], [0], [1], [0, 0, 1, 1], [], []>} : vector<8x24xf32>, vector<24x512xf32>, vector<8x512xf32> -> vector<8x512xf32>
    %c1_i32_21 = arith.constant 1 : i32
    %58 = tpu.dynamic_rotate %1 by %c1_i32_21 dim 1 : vector<8x512xf32>, i32 -> vector<8x512xf32>
    %cst_22 = arith.constant 0.000000e+00 : f32
    %59 = vector.broadcast %cst_22 : f32 to vector<8x512xf32>
    %60 = arith.select %42, %58, %59 : vector<8x512xi1>, vector<8x512xf32>
    %c511_i32_23 = arith.constant 511 : i32
    %61 = tpu.dynamic_rotate %1 by %c511_i32_23 dim 1 : vector<8x512xf32>, i32 -> vector<8x512xf32>
    %cst_24 = arith.constant 0.000000e+00 : f32
    %62 = vector.broadcast %cst_24 : f32 to vector<8x512xf32>
    %63 = arith.select %44, %61, %62 : vector<8x512xi1>, vector<8x512xf32>
    %64 = tpu.concatenate %60, %1, %63 in 0 : vector<8x512xf32>, vector<8x512xf32>, vector<8x512xf32> -> vector<24x512xf32>
    %c1 = arith.constant 1 : index
    %c0_25 = arith.constant 0 : index
    %c0_26 = arith.constant 0 : index
    %65 = vector.load %arg2[%c1, %c0_25, %c0_26] : memref<3x8x24xf32, #tpu.memory_space<vmem>>, vector<1x8x24xf32>
    %66 = vector.shape_cast %65 : vector<1x8x24xf32> to vector<8x24xf32>
    %cst_27 = arith.constant dense<0.000000e+00> : vector<8x512xf32>
    %67 = tpu.matmul %66, %64, %cst_27 {dimension_numbers = #tpu.dot_dimension_numbers<[1], [0], [0], [1], [0, 0, 1, 1], [], []>} : vector<8x24xf32>, vector<24x512xf32>, vector<8x512xf32> -> vector<8x512xf32>
    %68 = arith.addf %57, %67 : vector<8x512xf32>
    %c496_i32 = arith.constant 496 : i32
    %69 = tpu.dynamic_rotate %1 by %c496_i32 dim 1 : vector<8x512xf32>, i32 -> vector<8x512xf32>
    %cst_28 = arith.constant 0.000000e+00 : f32
    %70 = vector.broadcast %cst_28 : f32 to vector<8x512xf32>
    %71 = arith.select %40, %69, %70 : vector<8x512xi1>, vector<8x512xf32>
    %c1_i32_29 = arith.constant 1 : i32
    %72 = tpu.dynamic_rotate %71 by %c1_i32_29 dim 1 : vector<8x512xf32>, i32 -> vector<8x512xf32>
    %cst_30 = arith.constant 0.000000e+00 : f32
    %73 = vector.broadcast %cst_30 : f32 to vector<8x512xf32>
    %74 = arith.select %42, %72, %73 : vector<8x512xi1>, vector<8x512xf32>
    %c511_i32_31 = arith.constant 511 : i32
    %75 = tpu.dynamic_rotate %71 by %c511_i32_31 dim 1 : vector<8x512xf32>, i32 -> vector<8x512xf32>
    %cst_32 = arith.constant 0.000000e+00 : f32
    %76 = vector.broadcast %cst_32 : f32 to vector<8x512xf32>
    %77 = arith.select %44, %75, %76 : vector<8x512xi1>, vector<8x512xf32>
    %78 = tpu.concatenate %74, %71, %77 in 0 : vector<8x512xf32>, vector<8x512xf32>, vector<8x512xf32> -> vector<24x512xf32>
    %c2 = arith.constant 2 : index
    %c0_33 = arith.constant 0 : index
    %c0_34 = arith.constant 0 : index
    %79 = vector.load %arg2[%c2, %c0_33, %c0_34] : memref<3x8x24xf32, #tpu.memory_space<vmem>>, vector<1x8x24xf32>
    %80 = vector.shape_cast %79 : vector<1x8x24xf32> to vector<8x24xf32>
    %cst_35 = arith.constant dense<0.000000e+00> : vector<8x512xf32>
    %81 = tpu.matmul %80, %78, %cst_35 {dimension_numbers = #tpu.dot_dimension_numbers<[1], [0], [0], [1], [0, 0, 1, 1], [], []>} : vector<8x24xf32>, vector<24x512xf32>, vector<8x512xf32> -> vector<8x512xf32>
    %82 = arith.addf %68, %81 : vector<8x512xf32>
    %83 = vector.broadcast %2 : vector<8x1xf32> to vector<8x512xf32>
    %84 = arith.addf %82, %83 : vector<8x512xf32>
    %cst_36 = arith.constant 0.000000e+00 : f32
    %85 = vector.broadcast %cst_36 : f32 to vector<8x512xf32>
    %86 = arith.cmpf oge, %84, %85 : vector<8x512xf32>
    %87 = vector.broadcast %3 : vector<8x1xf32> to vector<8x512xf32>
    %88 = arith.mulf %87, %84 : vector<8x512xf32>
    %89 = arith.select %86, %84, %88 : vector<8x512xi1>, vector<8x512xf32>
    %c0_37 = arith.constant 0 : index
    %c0_38 = arith.constant 0 : index
    %90 = vector.load %arg6[%c0_37, %c0_38] : memref<24x512xf32, #tpu.memory_space<vmem>>, vector<8x512xf32>
    tpu.vector_store %arg6[%c0_37, %c0_38], %89 {strides = array<i32>} : memref<24x512xf32, #tpu.memory_space<vmem>>, vector<8x512xf32>,
    %91 = vector.extract_strided_slice %0 {offsets = [0, 2], sizes = [8, 1], strides = [1, 1]} : vector<8x8xf32> to vector<8x1xf32>
    %92 = vector.extract_strided_slice %0 {offsets = [0, 3], sizes = [8, 1], strides = [1, 1]} : vector<8x8xf32> to vector<8x1xf32>
    %c16_i32_39 = arith.constant 16 : i32
    %93 = tpu.dynamic_rotate %89 by %c16_i32_39 dim 1 : vector<8x512xf32>, i32 -> vector<8x512xf32>
    %cst_40 = arith.constant 0.000000e+00 : f32
    %94 = vector.broadcast %cst_40 : f32 to vector<8x512xf32>
    %95 = arith.select %38, %93, %94 : vector<8x512xi1>, vector<8x512xf32>
    %c1_i32_41 = arith.constant 1 : i32
    %96 = tpu.dynamic_rotate %95 by %c1_i32_41 dim 1 : vector<8x512xf32>, i32 -> vector<8x512xf32>
    %cst_42 = arith.constant 0.000000e+00 : f32
    %97 = vector.broadcast %cst_42 : f32 to vector<8x512xf32>
    %98 = arith.select %42, %96, %97 : vector<8x512xi1>, vector<8x512xf32>
    %c511_i32_43 = arith.constant 511 : i32
    %99 = tpu.dynamic_rotate %95 by %c511_i32_43 dim 1 : vector<8x512xf32>, i32 -> vector<8x512xf32>
    %cst_44 = arith.constant 0.000000e+00 : f32
    %100 = vector.broadcast %cst_44 : f32 to vector<8x512xf32>
    %101 = arith.select %44, %99, %100 : vector<8x512xi1>, vector<8x512xf32>
    %102 = tpu.concatenate %98, %95, %101 in 0 : vector<8x512xf32>, vector<8x512xf32>, vector<8x512xf32> -> vector<24x512xf32>
    %c0_45 = arith.constant 0 : index
    %c0_46 = arith.constant 0 : index
    %c0_47 = arith.constant 0 : index
    %103 = vector.load %arg3[%c0_45, %c0_46, %c0_47] : memref<3x8x24xf32, #tpu.memory_space<vmem>>, vector<1x8x24xf32>
    %104 = vector.shape_cast %103 : vector<1x8x24xf32> to vector<8x24xf32>
    %cst_48 = arith.constant dense<0.000000e+00> : vector<8x512xf32>
    %105 = tpu.matmul %104, %102, %cst_48 {dimension_numbers = #tpu.dot_dimension_numbers<[1], [0], [0], [1], [0, 0, 1, 1], [], []>} : vector<8x24xf32>, vector<24x512xf32>, vector<8x512xf32> -> vector<8x512xf32>
    %c1_i32_49 = arith.constant 1 : i32
    %106 = tpu.dynamic_rotate %89 by %c1_i32_49 dim 1 : vector<8x512xf32>, i32 -> vector<8x512xf32>
    %cst_50 = arith.constant 0.000000e+00 : f32
    %107 = vector.broadcast %cst_50 : f32 to vector<8x512xf32>
    %108 = arith.select %42, %106, %107 : vector<8x512xi1>, vector<8x512xf32>
    %c511_i32_51 = arith.constant 511 : i32
    %109 = tpu.dynamic_rotate %89 by %c511_i32_51 dim 1 : vector<8x512xf32>, i32 -> vector<8x512xf32>
    %cst_52 = arith.constant 0.000000e+00 : f32
    %110 = vector.broadcast %cst_52 : f32 to vector<8x512xf32>
    %111 = arith.select %44, %109, %110 : vector<8x512xi1>, vector<8x512xf32>
    %112 = tpu.concatenate %108, %89, %111 in 0 : vector<8x512xf32>, vector<8x512xf32>, vector<8x512xf32> -> vector<24x512xf32>
    %c1_53 = arith.constant 1 : index
    %c0_54 = arith.constant 0 : index
    %c0_55 = arith.constant 0 : index
    %113 = vector.load %arg3[%c1_53, %c0_54, %c0_55] : memref<3x8x24xf32, #tpu.memory_space<vmem>>, vector<1x8x24xf32>
    %114 = vector.shape_cast %113 : vector<1x8x24xf32> to vector<8x24xf32>
    %cst_56 = arith.constant dense<0.000000e+00> : vector<8x512xf32>
    %115 = tpu.matmul %114, %112, %cst_56 {dimension_numbers = #tpu.dot_dimension_numbers<[1], [0], [0], [1], [0, 0, 1, 1], [], []>} : vector<8x24xf32>, vector<24x512xf32>, vector<8x512xf32> -> vector<8x512xf32>
    %116 = arith.addf %105, %115 : vector<8x512xf32>
    %c496_i32_57 = arith.constant 496 : i32
    %117 = tpu.dynamic_rotate %89 by %c496_i32_57 dim 1 : vector<8x512xf32>, i32 -> vector<8x512xf32>
    %cst_58 = arith.constant 0.000000e+00 : f32
    %118 = vector.broadcast %cst_58 : f32 to vector<8x512xf32>
    %119 = arith.select %40, %117, %118 : vector<8x512xi1>, vector<8x512xf32>
    %c1_i32_59 = arith.constant 1 : i32
    %120 = tpu.dynamic_rotate %119 by %c1_i32_59 dim 1 : vector<8x512xf32>, i32 -> vector<8x512xf32>
    %cst_60 = arith.constant 0.000000e+00 : f32
    %121 = vector.broadcast %cst_60 : f32 to vector<8x512xf32>
    %122 = arith.select %42, %120, %121 : vector<8x512xi1>, vector<8x512xf32>
    %c511_i32_61 = arith.constant 511 : i32
    %123 = tpu.dynamic_rotate %119 by %c511_i32_61 dim 1 : vector<8x512xf32>, i32 -> vector<8x512xf32>
    %cst_62 = arith.constant 0.000000e+00 : f32
    %124 = vector.broadcast %cst_62 : f32 to vector<8x512xf32>
    %125 = arith.select %44, %123, %124 : vector<8x512xi1>, vector<8x512xf32>
    %126 = tpu.concatenate %122, %119, %125 in 0 : vector<8x512xf32>, vector<8x512xf32>, vector<8x512xf32> -> vector<24x512xf32>
    %c2_63 = arith.constant 2 : index
    %c0_64 = arith.constant 0 : index
    %c0_65 = arith.constant 0 : index
    %127 = vector.load %arg3[%c2_63, %c0_64, %c0_65] : memref<3x8x24xf32, #tpu.memory_space<vmem>>, vector<1x8x24xf32>
    %128 = vector.shape_cast %127 : vector<1x8x24xf32> to vector<8x24xf32>
    %cst_66 = arith.constant dense<0.000000e+00> : vector<8x512xf32>
    %129 = tpu.matmul %128, %126, %cst_66 {dimension_numbers = #tpu.dot_dimension_numbers<[1], [0], [0], [1], [0, 0, 1, 1], [], []>} : vector<8x24xf32>, vector<24x512xf32>, vector<8x512xf32> -> vector<8x512xf32>
    %130 = arith.addf %116, %129 : vector<8x512xf32>
    %131 = vector.broadcast %91 : vector<8x1xf32> to vector<8x512xf32>
    %132 = arith.addf %130, %131 : vector<8x512xf32>
    %cst_67 = arith.constant 0.000000e+00 : f32
    %133 = vector.broadcast %cst_67 : f32 to vector<8x512xf32>
    %134 = arith.cmpf oge, %132, %133 : vector<8x512xf32>
    %135 = vector.broadcast %92 : vector<8x1xf32> to vector<8x512xf32>
    %136 = arith.mulf %135, %132 : vector<8x512xf32>
    %137 = arith.select %134, %132, %136 : vector<8x512xi1>, vector<8x512xf32>
    %c8 = arith.constant 8 : index
    %c0_68 = arith.constant 0 : index
    %138 = vector.load %arg6[%c8, %c0_68] : memref<24x512xf32, #tpu.memory_space<vmem>>, vector<8x512xf32>
    tpu.vector_store %arg6[%c8, %c0_68], %137 {strides = array<i32>} : memref<24x512xf32, #tpu.memory_space<vmem>>, vector<8x512xf32>,
    %139 = vector.extract_strided_slice %0 {offsets = [0, 4], sizes = [8, 1], strides = [1, 1]} : vector<8x8xf32> to vector<8x1xf32>
    %140 = vector.extract_strided_slice %0 {offsets = [0, 5], sizes = [8, 1], strides = [1, 1]} : vector<8x8xf32> to vector<8x1xf32>
    %c16_i32_69 = arith.constant 16 : i32
    %141 = tpu.dynamic_rotate %137 by %c16_i32_69 dim 1 : vector<8x512xf32>, i32 -> vector<8x512xf32>
    %cst_70 = arith.constant 0.000000e+00 : f32
    %142 = vector.broadcast %cst_70 : f32 to vector<8x512xf32>
    %143 = arith.select %38, %141, %142 : vector<8x512xi1>, vector<8x512xf32>
    %c1_i32_71 = arith.constant 1 : i32
    %144 = tpu.dynamic_rotate %143 by %c1_i32_71 dim 1 : vector<8x512xf32>, i32 -> vector<8x512xf32>
    %cst_72 = arith.constant 0.000000e+00 : f32
    %145 = vector.broadcast %cst_72 : f32 to vector<8x512xf32>
    %146 = arith.select %42, %144, %145 : vector<8x512xi1>, vector<8x512xf32>
    %c511_i32_73 = arith.constant 511 : i32
    %147 = tpu.dynamic_rotate %143 by %c511_i32_73 dim 1 : vector<8x512xf32>, i32 -> vector<8x512xf32>
    %cst_74 = arith.constant 0.000000e+00 : f32
    %148 = vector.broadcast %cst_74 : f32 to vector<8x512xf32>
    %149 = arith.select %44, %147, %148 : vector<8x512xi1>, vector<8x512xf32>
    %150 = tpu.concatenate %146, %143, %149 in 0 : vector<8x512xf32>, vector<8x512xf32>, vector<8x512xf32> -> vector<24x512xf32>
    %c0_75 = arith.constant 0 : index
    %c0_76 = arith.constant 0 : index
    %c0_77 = arith.constant 0 : index
    %151 = vector.load %arg4[%c0_75, %c0_76, %c0_77] : memref<3x8x24xf32, #tpu.memory_space<vmem>>, vector<1x8x24xf32>
    %152 = vector.shape_cast %151 : vector<1x8x24xf32> to vector<8x24xf32>
    %cst_78 = arith.constant dense<0.000000e+00> : vector<8x512xf32>
    %153 = tpu.matmul %152, %150, %cst_78 {dimension_numbers = #tpu.dot_dimension_numbers<[1], [0], [0], [1], [0, 0, 1, 1], [], []>} : vector<8x24xf32>, vector<24x512xf32>, vector<8x512xf32> -> vector<8x512xf32>
    %c1_i32_79 = arith.constant 1 : i32
    %154 = tpu.dynamic_rotate %137 by %c1_i32_79 dim 1 : vector<8x512xf32>, i32 -> vector<8x512xf32>
    %cst_80 = arith.constant 0.000000e+00 : f32
    %155 = vector.broadcast %cst_80 : f32 to vector<8x512xf32>
    %156 = arith.select %42, %154, %155 : vector<8x512xi1>, vector<8x512xf32>
    %c511_i32_81 = arith.constant 511 : i32
    %157 = tpu.dynamic_rotate %137 by %c511_i32_81 dim 1 : vector<8x512xf32>, i32 -> vector<8x512xf32>
    %cst_82 = arith.constant 0.000000e+00 : f32
    %158 = vector.broadcast %cst_82 : f32 to vector<8x512xf32>
    %159 = arith.select %44, %157, %158 : vector<8x512xi1>, vector<8x512xf32>
    %160 = tpu.concatenate %156, %137, %159 in 0 : vector<8x512xf32>, vector<8x512xf32>, vector<8x512xf32> -> vector<24x512xf32>
    %c1_83 = arith.constant 1 : index
    %c0_84 = arith.constant 0 : index
    %c0_85 = arith.constant 0 : index
    %161 = vector.load %arg4[%c1_83, %c0_84, %c0_85] : memref<3x8x24xf32, #tpu.memory_space<vmem>>, vector<1x8x24xf32>
    %162 = vector.shape_cast %161 : vector<1x8x24xf32> to vector<8x24xf32>
    %cst_86 = arith.constant dense<0.000000e+00> : vector<8x512xf32>
    %163 = tpu.matmul %162, %160, %cst_86 {dimension_numbers = #tpu.dot_dimension_numbers<[1], [0], [0], [1], [0, 0, 1, 1], [], []>} : vector<8x24xf32>, vector<24x512xf32>, vector<8x512xf32> -> vector<8x512xf32>
    %164 = arith.addf %153, %163 : vector<8x512xf32>
    %c496_i32_87 = arith.constant 496 : i32
    %165 = tpu.dynamic_rotate %137 by %c496_i32_87 dim 1 : vector<8x512xf32>, i32 -> vector<8x512xf32>
    %cst_88 = arith.constant 0.000000e+00 : f32
    %166 = vector.broadcast %cst_88 : f32 to vector<8x512xf32>
    %167 = arith.select %40, %165, %166 : vector<8x512xi1>, vector<8x512xf32>
    %c1_i32_89 = arith.constant 1 : i32
    %168 = tpu.dynamic_rotate %167 by %c1_i32_89 dim 1 : vector<8x512xf32>, i32 -> vector<8x512xf32>
    %cst_90 = arith.constant 0.000000e+00 : f32
    %169 = vector.broadcast %cst_90 : f32 to vector<8x512xf32>
    %170 = arith.select %42, %168, %169 : vector<8x512xi1>, vector<8x512xf32>
    %c511_i32_91 = arith.constant 511 : i32
    %171 = tpu.dynamic_rotate %167 by %c511_i32_91 dim 1 : vector<8x512xf32>, i32 -> vector<8x512xf32>
    %cst_92 = arith.constant 0.000000e+00 : f32
    %172 = vector.broadcast %cst_92 : f32 to vector<8x512xf32>
    %173 = arith.select %44, %171, %172 : vector<8x512xi1>, vector<8x512xf32>
    %174 = tpu.concatenate %170, %167, %173 in 0 : vector<8x512xf32>, vector<8x512xf32>, vector<8x512xf32> -> vector<24x512xf32>
    %c2_93 = arith.constant 2 : index
    %c0_94 = arith.constant 0 : index
    %c0_95 = arith.constant 0 : index
    %175 = vector.load %arg4[%c2_93, %c0_94, %c0_95] : memref<3x8x24xf32, #tpu.memory_space<vmem>>, vector<1x8x24xf32>
    %176 = vector.shape_cast %175 : vector<1x8x24xf32> to vector<8x24xf32>
    %cst_96 = arith.constant dense<0.000000e+00> : vector<8x512xf32>
    %177 = tpu.matmul %176, %174, %cst_96 {dimension_numbers = #tpu.dot_dimension_numbers<[1], [0], [0], [1], [0, 0, 1, 1], [], []>} : vector<8x24xf32>, vector<24x512xf32>, vector<8x512xf32> -> vector<8x512xf32>
    %178 = arith.addf %164, %177 : vector<8x512xf32>
    %179 = vector.broadcast %139 : vector<8x1xf32> to vector<8x512xf32>
    %180 = arith.addf %178, %179 : vector<8x512xf32>
    %cst_97 = arith.constant 0.000000e+00 : f32
    %181 = vector.broadcast %cst_97 : f32 to vector<8x512xf32>
    %182 = arith.cmpf oge, %180, %181 : vector<8x512xf32>
    %183 = vector.broadcast %140 : vector<8x1xf32> to vector<8x512xf32>
    %184 = arith.mulf %183, %180 : vector<8x512xf32>
    %185 = arith.select %182, %180, %184 : vector<8x512xi1>, vector<8x512xf32>
    %c16 = arith.constant 16 : index
    %c0_98 = arith.constant 0 : index
    %186 = vector.load %arg6[%c16, %c0_98] : memref<24x512xf32, #tpu.memory_space<vmem>>, vector<8x512xf32>
    tpu.vector_store %arg6[%c16, %c0_98], %185 {strides = array<i32>} : memref<24x512xf32, #tpu.memory_space<vmem>>, vector<8x512xf32>,
    return
  }
  func.func @transform_0(%arg0: i32) -> (i32, i32) {
    %c0_i32 = arith.constant 0 : i32
    %c0_i32_0 = arith.constant 0 : i32
    return %c0_i32, %arg0 : i32, i32
  }
  func.func @transform_1(%arg0: i32) -> (i32, i32, i32) {
    %c0_i32 = arith.constant 0 : i32
    %c0_i32_0 = arith.constant 0 : i32
    %c0_i32_1 = arith.constant 0 : i32
    %c0_i32_2 = arith.constant 0 : i32
    return %c0_i32, %c0_i32_0, %c0_i32_1 : i32, i32, i32
  }
  func.func @transform_2(%arg0: i32) -> (i32, i32, i32) {
    %c0_i32 = arith.constant 0 : i32
    %c0_i32_0 = arith.constant 0 : i32
    %c0_i32_1 = arith.constant 0 : i32
    %c0_i32_2 = arith.constant 0 : i32
    return %c0_i32, %c0_i32_0, %c0_i32_1 : i32, i32, i32
  }
  func.func @transform_3(%arg0: i32) -> (i32, i32, i32) {
    %c0_i32 = arith.constant 0 : i32
    %c0_i32_0 = arith.constant 0 : i32
    %c0_i32_1 = arith.constant 0 : i32
    %c0_i32_2 = arith.constant 0 : i32
    return %c0_i32, %c0_i32_0, %c0_i32_1 : i32, i32, i32
  }
  func.func @transform_4(%arg0: i32) -> (i32, i32) {
    %c0_i32 = arith.constant 0 : i32
    %c0_i32_0 = arith.constant 0 : i32
    %c0_i32_1 = arith.constant 0 : i32
    return %c0_i32, %c0_i32_0 : i32, i32
  }
  func.func @transform_5(%arg0: i32) -> (i32, i32) {
    %c0_i32 = arith.constant 0 : i32
    %c0_i32_0 = arith.constant 0 : i32
    return %c0_i32, %arg0 : i32, i32
  }
}

</mosaic_0001>

<llo_original>
// kernel: res_conv_block.1
$region0: #{res_conv_block.1}
  #allocation0 [shape = 'u32[]', space=smem, size = 0x4, offset = 0x4, fixed_abs, tag = 'smem constant byte address 0x4 - core index']
  #allocation1 [shape = 'u32[144,128]{1,0:T(1,128)}', space=vmem, size = 0x12000, scoped, tag = 'internal scratch']
  %s0 = inlined_call_operand.vmem [shape: f32[8,512], index: 0, kind: input, shape index: {}]
  %s1 = inlined_call_operand.vmem [shape: f32[3,8,24], index: 1, kind: input, shape index: {}]
  %s2 = inlined_call_operand.vmem [shape: f32[3,8,24], index: 2, kind: input, shape index: {}]
  %s3 = inlined_call_operand.vmem [shape: f32[3,8,24], index: 3, kind: input, shape index: {}]
  %s4 = inlined_call_operand.vmem [shape: f32[8,8], index: 4, kind: input, shape index: {}]
  %s5 = inlined_call_operand.vmem [shape: f32[24,512], index: 5, kind: output, shape index: {}]
  %s6 = sld [smem:[#allocation0]]
  $region30: #{res_conv_block.1} parent=0
    _
  %s8 = ssub.s32 1, %s6
  %s9 = scalar_select 0, %s8, %s6
  // Predicated region
  $region2: #{res_conv_block.1} parent=0 // pred_check
    _
  $region3: #{res_conv_block.1} parent=0 // pred_check_branch
    %11 = sbr.rel (0) target = $region5
  $region4: #{res_conv_block.1} parent=0 // pred_region
    _
  $region5: #{res_conv_block.1} parent=0 // pred_fallthru
    _
  // Predicated region
  $region6: #{res_conv_block.1} parent=0 // pred_check
    _
  $region7: #{res_conv_block.1} parent=0 // pred_check_branch
    %13 = sbr.rel (0) target = $region9
  $region8: #{res_conv_block.1} parent=0 // pred_region
    _
  $region9: #{res_conv_block.1} parent=0 // pred_fallthru
    _
  // Predicated region
  $region10: #{res_conv_block.1} parent=0 // pred_check
    _
  $region11: #{res_conv_block.1} parent=0 // pred_check_branch
    %15 = sbr.rel (0) target = $region13
  $region12: #{res_conv_block.1} parent=0 // pred_region
    _
  $region13: #{res_conv_block.1} parent=0 // pred_fallthru
    _
  // Predicated region
  $region14: #{res_conv_block.1} parent=0 // pred_check
    _
  $region15: #{res_conv_block.1} parent=0 // pred_check_branch
    %17 = sbr.rel (0) target = $region17
  $region16: #{res_conv_block.1} parent=0 // pred_region
    _
  $region17: #{res_conv_block.1} parent=0 // pred_fallthru
    _
  // Predicated region
  $region18: #{res_conv_block.1} parent=0 // pred_check
    _
  $region19: #{res_conv_block.1} parent=0 // pred_check_branch
    %19 = sbr.rel (0) target = $region21
  $region20: #{res_conv_block.1} parent=0 // pred_region
    _
  $region21: #{res_conv_block.1} parent=0 // pred_fallthru
    _
  %v20 = vld [vmem:[%s4] sm:$0xff]
  %v21 = vld [vmem:[%s0] sm:$0xff]
  %v22 = vld [vmem:[%s0 + $0x8] sm:$0xff]
  %v23 = vld [vmem:[%s0 + $0x10] sm:$0xff]
  %v24 = vld [vmem:[%s0 + $0x18] sm:$0xff]
  %v25 = vlaneseq
  %v26 = vand.u32 %v25, 127
  %v27 = vadd.s32 %v26, 128
  %v28 = vadd.s32 %v26, 256
  %v29 = vadd.s32 %v26, 384
  %vm30 = vcmp.lt.s32.totalorder %v26, 0
  %v31 = vsub.s32 0, %v26
  %v32 = vsel %vm30, %v31, %v26
  %v33 = vshrl.u32 %v32, 8
  %v34 = vand.u32 %v32, 255
  %v35 = vsub.s32 0, %v34
  %v36 = vsel %vm30, %v35, %v34
  %vm37 = vcmp.lt.s32.totalorder %v27, 0
  %v38 = vsub.s32 0, %v27
  %v39 = vsel %vm37, %v38, %v27
  %v40 = vshrl.u32 %v39, 8
  %v41 = vand.u32 %v39, 255
  %v42 = vsub.s32 0, %v41
  %v43 = vsel %vm37, %v42, %v41
  %vm44 = vcmp.lt.s32.totalorder %v28, 0
  %v45 = vsub.s32 0, %v28
  %v46 = vsel %vm44, %v45, %v28
  %v47 = vshrl.u32 %v46, 8
  %v48 = vand.u32 %v46, 255
  %v49 = vsub.s32 0, %v48
  %v50 = vsel %vm44, %v49, %v48
  %vm51 = vcmp.lt.s32.totalorder %v29, 0
  %v52 = vsub.s32 0, %v29
  %v53 = vsel %vm51, %v52, %v29
  %v54 = vshrl.u32 %v53, 8
  %v55 = vand.u32 %v53, 255
  %v56 = vsub.s32 0, %v55
  %v57 = vsel %vm51, %v56, %v55
  %vm58 = vcmp.ne.s32.totalorder %v36, 0
  %vm59 = vcmp.ne.s32.totalorder %v43, 0
  %vm60 = vcmp.ne.s32.totalorder %v50, 0
  %vm61 = vcmp.ne.s32.totalorder %v57, 0
  %vm62 = vcmp.lt.s32.totalorder %v36, 0
  %vm63 = vcmp.lt.s32.totalorder %v43, 0
  %vm64 = vcmp.lt.s32.totalorder %v50, 0
  %vm65 = vcmp.lt.s32.totalorder %v57, 0
  %vm66 = vmand %vm62, %vm58
  %vm67 = vmand %vm63, %vm59
  %vm68 = vmand %vm64, %vm60
  %vm69 = vmand %vm65, %vm61
  %v70 = vadd.s32 %v36, 256
  %v71 = vadd.s32 %v43, 256
  %v72 = vadd.s32 %v50, 256
  %v73 = vadd.s32 %v57, 256
  %v74 = vsel %vm66, %v70, %v36
  %v75 = vsel %vm67, %v71, %v43
  %v76 = vsel %vm68, %v72, %v50
  %v77 = vsel %vm69, %v73, %v57
  %vm78 = vcmp.lt.s32.totalorder %v74, 0
  %v79 = vsub.s32 0, %v74
  %v80 = vsel %vm78, %v79, %v74
  %v81 = vshrl.u32 %v80, 4
  %v82 = vand.u32 %v80, 15
  %v83 = vsub.s32 0, %v82
  %v84 = vsel %vm78, %v83, %v82
  %vm85 = vcmp.lt.s32.totalorder %v75, 0
  %v86 = vsub.s32 0, %v75
  %v87 = vsel %vm85, %v86, %v75
  %v88 = vshrl.u32 %v87, 4
  %v89 = vand.u32 %v87, 15
  %v90 = vsub.s32 0, %v89
  %v91 = vsel %vm85, %v90, %v89
  %vm92 = vcmp.lt.s32.totalorder %v76, 0
  %v93 = vsub.s32 0, %v76
  %v94 = vsel %vm92, %v93, %v76
  %v95 = vshrl.u32 %v94, 4
  %v96 = vand.u32 %v94, 15
  %v97 = vsub.s32 0, %v96
  %v98 = vsel %vm92, %v97, %v96
  %vm99 = vcmp.lt.s32.totalorder %v77, 0
  %v100 = vsub.s32 0, %v77
  %v101 = vsel %vm99, %v100, %v77
  %v102 = vshrl.u32 %v101, 4
  %v103 = vand.u32 %v101, 15
  %v104 = vsub.s32 0, %v103
  %v105 = vsel %vm99, %v104, %v103
  %vm106 = vcmp.ne.s32.totalorder %v84, 0
  %vm107 = vcmp.ne.s32.totalorder %v91, 0
  %vm108 = vcmp.ne.s32.totalorder %v98, 0
  %vm109 = vcmp.ne.s32.totalorder %v105, 0
  %vm110 = vcmp.lt.s32.totalorder %v84, 0
  %vm111 = vcmp.lt.s32.totalorder %v91, 0
  %vm112 = vcmp.lt.s32.totalorder %v98, 0
  %vm113 = vcmp.lt.s32.totalorder %v105, 0
  %vm114 = vmand %vm110, %vm106
  %vm115 = vmand %vm111, %vm107
  %vm116 = vmand %vm112, %vm108
  %vm117 = vmand %vm113, %vm109
  %v118 = vadd.s32 %v84, 16
  %v119 = vadd.s32 %v91, 16
  %v120 = vadd.s32 %v98, 16
  %v121 = vadd.s32 %v105, 16
  %v122 = vsel %vm114, %v118, %v84
  %v123 = vsel %vm115, %v119, %v91
  %v124 = vsel %vm116, %v120, %v98
  %v125 = vsel %vm117, %v121, %v105
  %vm126 = vcmp.ge.s32.totalorder %v74, 16
  %vm127 = vcmp.ge.s32.totalorder %v75, 16
  %vm128 = vcmp.ge.s32.totalorder %v76, 16
  %vm129 = vcmp.ge.s32.totalorder %v77, 16
  %vm130 = vcmp.lt.s32.totalorder %v74, 240
  %vm131 = vcmp.lt.s32.totalorder %v75, 240
  %vm132 = vcmp.lt.s32.totalorder %v76, 240
  %vm133 = vcmp.lt.s32.totalorder %v77, 240
  %vm134 = vcmp.ge.s32.totalorder %v122, 1
  %vm135 = vcmp.ge.s32.totalorder %v123, 1
  %vm136 = vcmp.ge.s32.totalorder %v124, 1
  %vm137 = vcmp.ge.s32.totalorder %v125, 1
  %vm138 = vcmp.le.s32.totalorder %v122, 14
  %vm139 = vcmp.le.s32.totalorder %v123, 14
  %vm140 = vcmp.le.s32.totalorder %v124, 14
  %vm141 = vcmp.le.s32.totalorder %v125, 14
  %142 = vrot.lane.b32.xlu0 %v21, 16
  %v143 = vpop.permute.xlu0 %142
  %144 = vrot.lane.b32.xlu0 %v22, 16
  %v145 = vpop.permute.xlu0 %144
  %146 = vrot.lane.b32.xlu0 %v23, 16
  %v147 = vpop.permute.xlu0 %146
  %148 = vrot.lane.b32.xlu0 %v24, 16
  %v149 = vpop.permute.xlu0 %148
  %vm150 = vcmp.lt.s32.totalorder %v26, 16
  %v151 = vsel %vm150, %v147, %v149
  %v152 = vsel %vm150, %v145, %v147
  %v153 = vsel %vm150, %v143, %v145
  %v154 = vsel %vm150, %v149, %v143
  %v155 = vsel %vm126, %v154, 0.0
  %v156 = vsel %vm127, %v153, 0.0
  %v157 = vsel %vm128, %v152, 0.0
  %v158 = vsel %vm129, %v151, 0.0
  %159 = vrot.lane.b32.xlu0 %v155, 1
  %v160 = vpop.permute.xlu0 %159
  %161 = vrot.lane.b32.xlu0 %v156, 1
  %v162 = vpop.permute.xlu0 %161
  %163 = vrot.lane.b32.xlu0 %v157, 1
  %v164 = vpop.permute.xlu0 %163
  %165 = vrot.lane.b32.xlu0 %v158, 1
  %v166 = vpop.permute.xlu0 %165
  %vm167 = vcmp.lt.s32.totalorder %v26, 1
  %v168 = vsel %vm167, %v164, %v166
  %v169 = vsel %vm167, %v162, %v164
  %v170 = vsel %vm167, %v160, %v162
  %v171 = vsel %vm167, %v166, %v160
  %v172 = vsel %vm134, %v171, 0.0
  %v173 = vsel %vm135, %v170, 0.0
  %v174 = vsel %vm136, %v169, 0.0
  %v175 = vsel %vm137, %v168, 0.0
  %176 = vrot.lane.b32.xlu0 %v155, 127
  %v177 = vpop.permute.xlu0 %176
  %178 = vrot.lane.b32.xlu0 %v156, 127
  %v179 = vpop.permute.xlu0 %178
  %180 = vrot.lane.b32.xlu0 %v157, 127
  %v181 = vpop.permute.xlu0 %180
  %182 = vrot.lane.b32.xlu0 %v158, 127
  %v183 = vpop.permute.xlu0 %182
  %vm184 = vcmp.lt.s32.totalorder %v26, 127
  %v185 = vsel %vm184, %v181, %v183
  %v186 = vsel %vm184, %v179, %v181
  %v187 = vsel %vm184, %v177, %v179
  %v188 = vsel %vm184, %v183, %v177
  %v189 = vsel %vm138, %v187, 0.0
  %v190 = vsel %vm139, %v186, 0.0
  %v191 = vsel %vm140, %v185, 0.0
  %v192 = vsel %vm141, %v188, 0.0
  %v193 = vld [vmem:[%s1] sm:$0xff]
  %194 = vrot.lane.b32.xlu0 %v21, 1
  %v195 = vpop.permute.xlu0 %194
  %196 = vrot.lane.b32.xlu0 %v22, 1
  %v197 = vpop.permute.xlu0 %196
  %198 = vrot.lane.b32.xlu0 %v23, 1
  %v199 = vpop.permute.xlu0 %198
  %200 = vrot.lane.b32.xlu0 %v24, 1
  %v201 = vpop.permute.xlu0 %200
  %v202 = vsel %vm167, %v199, %v201
  %v203 = vsel %vm167, %v197, %v199
  %v204 = vsel %vm167, %v195, %v197
  %v205 = vsel %vm167, %v201, %v195
  %v206 = vsel %vm134, %v205, 0.0
  %v207 = vsel %vm135, %v204, 0.0
  %v208 = vsel %vm136, %v203, 0.0
  %v209 = vsel %vm137, %v202, 0.0
  %210 = vrot.lane.b32.xlu0 %v21, 127
  %v211 = vpop.permute.xlu0 %210
  %212 = vrot.lane.b32.xlu0 %v22, 127
  %v213 = vpop.permute.xlu0 %212
  %214 = vrot.lane.b32.xlu0 %v23, 127
  %v215 = vpop.permute.xlu0 %214
  %216 = vrot.lane.b32.xlu0 %v24, 127
  %v217 = vpop.permute.xlu0 %216
  %v218 = vsel %vm184, %v215, %v217
  %v219 = vsel %vm184, %v213, %v215
  %v220 = vsel %vm184, %v211, %v213
  %v221 = vsel %vm184, %v217, %v211
  %v222 = vsel %vm138, %v220, 0.0
  %v223 = vsel %vm139, %v219, 0.0
  %v224 = vsel %vm140, %v218, 0.0
  %v225 = vsel %vm141, %v221, 0.0
  %s226 = scalar_lea.vmem %s1, 8
  %v227 = vld [vmem:[%s226] sm:$0xff]
  %vm228 = vcmask 195584
  %v230 = vsel %vm228, %v227, 0
  %232 = vmatprep.subr.mxu0 %v207
  %233 = vmatpush1.msra.mxu0 %v206
  %234 = vmatprep.subr.mxu0 %v22
  %235 = vmatpush1.msra.mxu0 %v21
  %236 = vmatprep.subr.mxu0 %v223
  %237 = vmatpush1.msra.mxu0 %v222
  %238 = vmatprep.subr.mxu0 0.0
  %239 = vmatpush1.msra.mxu0 0.0
  %240 = vmatprep.subr.mxu0 0.0
  %241 = vmatpush1.msra.mxu0 0.0
  %242 = vmatprep.subr.mxu0 0.0
  %243 = vmatpush1.msra.mxu0 0.0
  %244 = vmatprep.subr.mxu0 0.0
  %245 = vmatpush1.msra.mxu0 0.0
  %246 = vmatprep.subr.mxu0 0.0
  %247 = vmatpush1.msra.mxu0 0.0
  %248 = vmatprep.subr.mxu0 0.0
  %249 = vmatpush1.msra.mxu0 0.0
  %250 = vmatprep.subr.mxu0 0.0
  %251 = vmatpush1.msra.mxu0 0.0
  %252 = vmatprep.subr.mxu0 0.0
  %253 = vmatpush1.msra.mxu0 0.0
  %254 = vmatprep.subr.mxu0 0.0
  %255 = vmatpush1.msra.mxu0 0.0
  %256 = vmatprep.subr.mxu0 0.0
  %257 = vmatpush1.msra.mxu0 0.0
  %258 = vmatprep.subr.mxu0 0.0
  %259 = vmatpush1.msra.mxu0 0.0
  %260 = vmatprep.subr.mxu0 0.0
  %261 = vmatpush1.msra.mxu0 0.0
  %262 = vmatprep.subr.mxu0 0.0
  %263 = vmatpush1.msra.mxu0 0.0
  %264 = vmatprep.subr.mxu0 0.0
  %265 = vmatpush1.msra.mxu0 0.0
  %266 = vmatprep.subr.mxu0 0.0
  %267 = vmatpush1.msra.mxu0 0.0
  %268 = vmatprep.subr.mxu0 0.0
  %269 = vmatpush1.msra.mxu0 0.0
  %270 = vmatprep.subr.mxu0 0.0
  %271 = vmatpush1.msra.mxu0 0.0
  %272 = vmatprep.subr.mxu0 0.0
  %273 = vmatpush1.msra.mxu0 0.0
  %274 = vmatprep.subr.mxu0 0.0
  %275 = vmatpush1.msra.mxu0 0.0
  %276 = vmatprep.subr.mxu0 0.0
  %277 = vmatpush1.msra.mxu0 0.0
  %278 = vmatprep.subr.mxu0 0.0
  %279 = vmatpush1.msra.mxu0 0.0
  %280 = vmatprep.subr.mxu0 0.0
  %281 = vmatpush1.msra.mxu0 0.0
  %282 = vmatprep.subr.mxu0 0.0
  %283 = vmatpush1.msra.mxu0 0.0
  %284 = vmatprep.subr.mxu0 0.0
  %285 = vmatpush1.msra.mxu0 0.0
  %286 = vmatprep.subr.mxu0 0.0
  %287 = vmatpush1.msra.mxu0 0.0
  %288 = vmatprep.subr.mxu0 0.0
  %289 = vmatpush1.msra.mxu0 0.0
  %290 = vmatprep.subr.mxu0 0.0
  %291 = vmatpush1.msra.mxu0 0.0
  %292 = vmatprep.subr.mxu0 0.0
  %293 = vmatpush1.msra.mxu0 0.0
  %294 = vmatprep.subr.mxu0 0.0
  %295 = vmatpush1.msra.mxu0 0.0
  %296 = vmatprep.mubr.f32.mxu0 0.0
  %297 = vmatmul.mubr.f32.gmra.mrb[0].mxu0 %v230
  %v298 = vpop.f32.mrb[0].mxu0
  %v299 = vadd.f32 0.0, %v298
  %v300 = vpop.f32.mrb[0].mxu0
  %v301 = vadd.f32 0.0, %v300
  %302 = vdwg.mxu0
  %303 = vmatprep.subr.mxu0 %v209
  %304 = vmatpush1.msra.mxu0 %v208
  %305 = vmatprep.subr.mxu0 %v24
  %306 = vmatpush1.msra.mxu0 %v23
  %307 = vmatprep.subr.mxu0 %v225
  %308 = vmatpush1.msra.mxu0 %v224
  %309 = vmatprep.subr.mxu0 0.0
  %310 = vmatpush1.msra.mxu0 0.0
  %311 = vmatprep.subr.mxu0 0.0
  %312 = vmatpush1.msra.mxu0 0.0
  %313 = vmatprep.subr.mxu0 0.0
  %314 = vmatpush1.msra.mxu0 0.0
  %315 = vmatprep.subr.mxu0 0.0
  %316 = vmatpush1.msra.mxu0 0.0
  %317 = vmatprep.subr.mxu0 0.0
  %318 = vmatpush1.msra.mxu0 0.0
  %319 = vmatprep.subr.mxu0 0.0
  %320 = vmatpush1.msra.mxu0 0.0
  %321 = vmatprep.subr.mxu0 0.0
  %322 = vmatpush1.msra.mxu0 0.0
  %323 = vmatprep.subr.mxu0 0.0
  %324 = vmatpush1.msra.mxu0 0.0
  %325 = vmatprep.subr.mxu0 0.0
  %326 = vmatpush1.msra.mxu0 0.0
  %327 = vmatprep.subr.mxu0 0.0
  %328 = vmatpush1.msra.mxu0 0.0
  %329 = vmatprep.subr.mxu0 0.0
  %330 = vmatpush1.msra.mxu0 0.0
  %331 = vmatprep.subr.mxu0 0.0
  %332 = vmatpush1.msra.mxu0 0.0
  %333 = vmatprep.subr.mxu0 0.0
  %334 = vmatpush1.msra.mxu0 0.0
  %335 = vmatprep.subr.mxu0 0.0
  %336 = vmatpush1.msra.mxu0 0.0
  %337 = vmatprep.subr.mxu0 0.0
  %338 = vmatpush1.msra.mxu0 0.0
  %339 = vmatprep.subr.mxu0 0.0
  %340 = vmatpush1.msra.mxu0 0.0
  %341 = vmatprep.subr.mxu0 0.0
  %342 = vmatpush1.msra.mxu0 0.0
  %343 = vmatprep.subr.mxu0 0.0
  %344 = vmatpush1.msra.mxu0 0.0
  %345 = vmatprep.subr.mxu0 0.0
  %346 = vmatpush1.msra.mxu0 0.0
  %347 = vmatprep.subr.mxu0 0.0
  %348 = vmatpush1.msra.mxu0 0.0
  %349 = vmatprep.subr.mxu0 0.0
  %350 = vmatpush1.msra.mxu0 0.0
  %351 = vmatprep.subr.mxu0 0.0
  %352 = vmatpush1.msra.mxu0 0.0
  %353 = vmatprep.subr.mxu0 0.0
  %354 = vmatpush1.msra.mxu0 0.0
  %355 = vmatprep.subr.mxu0 0.0
  %356 = vmatpush1.msra.mxu0 0.0
  %357 = vmatprep.subr.mxu0 0.0
  %358 = vmatpush1.msra.mxu0 0.0
  %359 = vmatprep.subr.mxu0 0.0
  %360 = vmatpush1.msra.mxu0 0.0
  %361 = vmatprep.subr.mxu0 0.0
  %362 = vmatpush1.msra.mxu0 0.0
  %363 = vmatprep.subr.mxu0 0.0
  %364 = vmatpush1.msra.mxu0 0.0
  %365 = vmatprep.subr.mxu0 0.0
  %366 = vmatpush1.msra.mxu0 0.0
  %367 = vmatprep.mubr.f32.mxu0 0.0
  %368 = vmatmul.mubr.f32.gmra.mrb[0].mxu0 %v230
  %v369 = vpop.f32.mrb[0].mxu0
  %v370 = vadd.f32 0.0, %v369
  %v371 = vpop.f32.mrb[0].mxu0
  %v372 = vadd.f32 0.0, %v371
  %373 = vdwg.mxu0
  %v375 = vsel %vm228, %v193, 0
  %377 = vmatprep.subr.mxu0 %v173
  %378 = vmatpush1.msra.mxu0 %v172
  %379 = vmatprep.subr.mxu0 %v156
  %380 = vmatpush1.msra.mxu0 %v155
  %381 = vmatprep.subr.mxu0 %v190
  %382 = vmatpush1.msra.mxu0 %v189
  %383 = vmatprep.subr.mxu0 0.0
  %384 = vmatpush1.msra.mxu0 0.0
  %385 = vmatprep.subr.mxu0 0.0
  %386 = vmatpush1.msra.mxu0 0.0
  %387 = vmatprep.subr.mxu0 0.0
  %388 = vmatpush1.msra.mxu0 0.0
  %389 = vmatprep.subr.mxu0 0.0
  %390 = vmatpush1.msra.mxu0 0.0
  %391 = vmatprep.subr.mxu0 0.0
  %392 = vmatpush1.msra.mxu0 0.0
  %393 = vmatprep.subr.mxu0 0.0
  %394 = vmatpush1.msra.mxu0 0.0
  %395 = vmatprep.subr.mxu0 0.0
  %396 = vmatpush1.msra.mxu0 0.0
  %397 = vmatprep.subr.mxu0 0.0
  %398 = vmatpush1.msra.mxu0 0.0
  %399 = vmatprep.subr.mxu0 0.0
  %400 = vmatpush1.msra.mxu0 0.0
  %401 = vmatprep.subr.mxu0 0.0
  %402 = vmatpush1.msra.mxu0 0.0
  %403 = vmatprep.subr.mxu0 0.0
  %404 = vmatpush1.msra.mxu0 0.0
  %405 = vmatprep.subr.mxu0 0.0
  %406 = vmatpush1.msra.mxu0 0.0
  %407 = vmatprep.subr.mxu0 0.0
  %408 = vmatpush1.msra.mxu0 0.0
  %409 = vmatprep.subr.mxu0 0.0
  %410 = vmatpush1.msra.mxu0 0.0
  %411 = vmatprep.subr.mxu0 0.0
  %412 = vmatpush1.msra.mxu0 0.0
  %413 = vmatprep.subr.mxu0 0.0
  %414 = vmatpush1.msra.mxu0 0.0
  %415 = vmatprep.subr.mxu0 0.0
  %416 = vmatpush1.msra.mxu0 0.0
  %417 = vmatprep.subr.mxu0 0.0
  %418 = vmatpush1.msra.mxu0 0.0
  %419 = vmatprep.subr.mxu0 0.0
  %420 = vmatpush1.msra.mxu0 0.0
  %421 = vmatprep.subr.mxu0 0.0
  %422 = vmatpush1.msra.mxu0 0.0
  %423 = vmatprep.subr.mxu0 0.0
  %424 = vmatpush1.msra.mxu0 0.0
  %425 = vmatprep.subr.mxu0 0.0
  %426 = vmatpush1.msra.mxu0 0.0
  %427 = vmatprep.subr.mxu0 0.0
  %428 = vmatpush1.msra.mxu0 0.0
  %429 = vmatprep.subr.mxu0 0.0
  %430 = vmatpush1.msra.mxu0 0.0
  %431 = vmatprep.subr.mxu0 0.0
  %432 = vmatpush1.msra.mxu0 0.0
  %433 = vmatprep.subr.mxu0 0.0
  %434 = vmatpush1.msra.mxu0 0.0
  %435 = vmatprep.subr.mxu0 0.0
  %436 = vmatpush1.msra.mxu0 0.0
  %437 = vmatprep.subr.mxu0 0.0
  %438 = vmatpush1.msra.mxu0 0.0
  %439 = vmatprep.subr.mxu0 0.0
  %440 = vmatpush1.msra.mxu0 0.0
  %441 = vmatprep.mubr.f32.mxu0 0.0
  %442 = vmatmul.mubr.f32.gmra.mrb[0].mxu0 %v375
  %v443 = vpop.f32.mrb[0].mxu0
  %v444 = vadd.f32 %v299, %v443
  %v445 = vpop.f32.mrb[0].mxu0
  %v446 = vadd.f32 %v301, %v445
  %447 = vdwg.mxu0
  %448 = vmatprep.subr.mxu0 %v175
  %449 = vmatpush1.msra.mxu0 %v174
  %450 = vmatprep.subr.mxu0 %v158
  %451 = vmatpush1.msra.mxu0 %v157
  %452 = vmatprep.subr.mxu0 %v192
  %453 = vmatpush1.msra.mxu0 %v191
  %454 = vmatprep.subr.mxu0 0.0
  %455 = vmatpush1.msra.mxu0 0.0
  %456 = vmatprep.subr.mxu0 0.0
  %457 = vmatpush1.msra.mxu0 0.0
  %458 = vmatprep.subr.mxu0 0.0
  %459 = vmatpush1.msra.mxu0 0.0
  %460 = vmatprep.subr.mxu0 0.0
  %461 = vmatpush1.msra.mxu0 0.0
  %462 = vmatprep.subr.mxu0 0.0
  %463 = vmatpush1.msra.mxu0 0.0
  %464 = vmatprep.subr.mxu0 0.0
  %465 = vmatpush1.msra.mxu0 0.0
  %466 = vmatprep.subr.mxu0 0.0
  %467 = vmatpush1.msra.mxu0 0.0
  %468 = vmatprep.subr.mxu0 0.0
  %469 = vmatpush1.msra.mxu0 0.0
  %470 = vmatprep.subr.mxu0 0.0
  %471 = vmatpush1.msra.mxu0 0.0
  %472 = vmatprep.subr.mxu0 0.0
  %473 = vmatpush1.msra.mxu0 0.0
  %474 = vmatprep.subr.mxu0 0.0
  %475 = vmatpush1.msra.mxu0 0.0
  %476 = vmatprep.subr.mxu0 0.0
  %477 = vmatpush1.msra.mxu0 0.0
  %478 = vmatprep.subr.mxu0 0.0
  %479 = vmatpush1.msra.mxu0 0.0
  %480 = vmatprep.subr.mxu0 0.0
  %481 = vmatpush1.msra.mxu0 0.0
  %482 = vmatprep.subr.mxu0 0.0
  %483 = vmatpush1.msra.mxu0 0.0
  %484 = vmatprep.subr.mxu0 0.0
  %485 = vmatpush1.msra.mxu0 0.0
  %486 = vmatprep.subr.mxu0 0.0
  %487 = vmatpush1.msra.mxu0 0.0
  %488 = vmatprep.subr.mxu0 0.0
  %489 = vmatpush1.msra.mxu0 0.0
  %490 = vmatprep.subr.mxu0 0.0
  %491 = vmatpush1.msra.mxu0 0.0
  %492 = vmatprep.subr.mxu0 0.0
  %493 = vmatpush1.msra.mxu0 0.0
  %494 = vmatprep.subr.mxu0 0.0
  %495 = vmatpush1.msra.mxu0 0.0
  %496 = vmatprep.subr.mxu0 0.0
  %497 = vmatpush1.msra.mxu0 0.0
  %498 = vmatprep.subr.mxu0 0.0
  %499 = vmatpush1.msra.mxu0 0.0
  %500 = vmatprep.subr.mxu0 0.0
  %501 = vmatpush1.msra.mxu0 0.0
  %502 = vmatprep.subr.mxu0 0.0
  %503 = vmatpush1.msra.mxu0 0.0
  %504 = vmatprep.subr.mxu0 0.0
  %505 = vmatpush1.msra.mxu0 0.0
  %506 = vmatprep.subr.mxu0 0.0
  %507 = vmatpush1.msra.mxu0 0.0
  %508 = vmatprep.subr.mxu0 0.0
  %509 = vmatpush1.msra.mxu0 0.0
  %510 = vmatprep.subr.mxu0 0.0
  %511 = vmatpush1.msra.mxu0 0.0
  %512 = vmatprep.mubr.f32.mxu0 0.0
  %513 = vmatmul.mubr.f32.gmra.mrb[0].mxu0 %v375
  %v514 = vpop.f32.mrb[0].mxu0
  %v515 = vadd.f32 %v370, %v514
  %v516 = vpop.f32.mrb[0].mxu0
  %v517 = vadd.f32 %v372, %v516
  %518 = vdwg.mxu0
  %519 = vrot.lane.b32.xlu0 %v21, 112
  %v520 = vpop.permute.xlu0 %519
  %521 = vrot.lane.b32.xlu0 %v22, 112
  %v522 = vpop.permute.xlu0 %521
  %523 = vrot.lane.b32.xlu0 %v23, 112
  %v524 = vpop.permute.xlu0 %523
  %525 = vrot.lane.b32.xlu0 %v24, 112
  %v526 = vpop.permute.xlu0 %525
  %vm527 = vcmp.lt.s32.totalorder %v26, 112
  %v528 = vsel %vm527, %v524, %v526
  %v529 = vsel %vm527, %v522, %v524
  %v530 = vsel %vm527, %v520, %v522
  %v531 = vsel %vm527, %v526, %v520
  %v532 = vsel %vm130, %v530, 0.0
  %v533 = vsel %vm131, %v529, 0.0
  %v534 = vsel %vm132, %v528, 0.0
  %v535 = vsel %vm133, %v531, 0.0
  %536 = vrot.lane.b32.xlu0 %v532, 1
  %v537 = vpop.permute.xlu0 %536
  %538 = vrot.lane.b32.xlu0 %v533, 1
  %v539 = vpop.permute.xlu0 %538
  %540 = vrot.lane.b32.xlu0 %v534, 1
  %v541 = vpop.permute.xlu0 %540
  %542 = vrot.lane.b32.xlu0 %v535, 1
  %v543 = vpop.permute.xlu0 %542
  %v544 = vsel %vm167, %v541, %v543
  %v545 = vsel %vm167, %v539, %v541
  %v546 = vsel %vm167, %v537, %v539
  %v547 = vsel %vm167, %v543, %v537
  %v548 = vsel %vm134, %v547, 0.0
  %v549 = vsel %vm135, %v546, 0.0
  %v550 = vsel %vm136, %v545, 0.0
  %v551 = vsel %vm137, %v544, 0.0
  %552 = vrot.lane.b32.xlu0 %v532, 127
  %v553 = vpop.permute.xlu0 %552
  %554 = vrot.lane.b32.xlu0 %v533, 127
  %v555 = vpop.permute.xlu0 %554
  %556 = vrot.lane.b32.xlu0 %v534, 127
  %v557 = vpop.permute.xlu0 %556
  %558 = vrot.lane.b32.xlu0 %v535, 127
  %v559 = vpop.permute.xlu0 %558
  %v560 = vsel %vm184, %v557, %v559
  %v561 = vsel %vm184, %v555, %v557
  %v562 = vsel %vm184, %v553, %v555
  %v563 = vsel %vm184, %v559, %v553
  %v564 = vsel %vm138, %v562, 0.0
  %v565 = vsel %vm139, %v561, 0.0
  %v566 = vsel %vm140, %v560, 0.0
  %v567 = vsel %vm141, %v563, 0.0
  %s568 = scalar_lea.vmem %s1, 16
  %v569 = vld [vmem:[%s568] sm:$0xff]
  %v571 = vsel %vm228, %v569, 0
  %573 = vmatprep.subr.mxu0 %v549
  %574 = vmatpush1.msra.mxu0 %v548
  %575 = vmatprep.subr.mxu0 %v533
  %576 = vmatpush1.msra.mxu0 %v532
  %577 = vmatprep.subr.mxu0 %v565
  %578 = vmatpush1.msra.mxu0 %v564
  %579 = vmatprep.subr.mxu0 0.0
  %580 = vmatpush1.msra.mxu0 0.0
  %581 = vmatprep.subr.mxu0 0.0
  %582 = vmatpush1.msra.mxu0 0.0
  %583 = vmatprep.subr.mxu0 0.0
  %584 = vmatpush1.msra.mxu0 0.0
  %585 = vmatprep.subr.mxu0 0.0
  %586 = vmatpush1.msra.mxu0 0.0
  %587 = vmatprep.subr.mxu0 0.0
  %588 = vmatpush1.msra.mxu0 0.0
  %589 = vmatprep.subr.mxu0 0.0
  %590 = vmatpush1.msra.mxu0 0.0
  %591 = vmatprep.subr.mxu0 0.0
  %592 = vmatpush1.msra.mxu0 0.0
  %593 = vmatprep.subr.mxu0 0.0
  %594 = vmatpush1.msra.mxu0 0.0
  %595 = vmatprep.subr.mxu0 0.0
  %596 = vmatpush1.msra.mxu0 0.0
  %597 = vmatprep.subr.mxu0 0.0
  %598 = vmatpush1.msra.mxu0 0.0
  %599 = vmatprep.subr.mxu0 0.0
  %600 = vmatpush1.msra.mxu0 0.0
  %601 = vmatprep.subr.mxu0 0.0
  %602 = vmatpush1.msra.mxu0 0.0
  %603 = vmatprep.subr.mxu0 0.0
  %604 = vmatpush1.msra.mxu0 0.0
  %605 = vmatprep.subr.mxu0 0.0
  %606 = vmatpush1.msra.mxu0 0.0
  %607 = vmatprep.subr.mxu0 0.0
  %608 = vmatpush1.msra.mxu0 0.0
  %609 = vmatprep.subr.mxu0 0.0
  %610 = vmatpush1.msra.mxu0 0.0
  %611 = vmatprep.subr.mxu0 0.0
  %612 = vmatpush1.msra.mxu0 0.0
  %613 = vmatprep.subr.mxu0 0.0
  %614 = vmatpush1.msra.mxu0 0.0
  %615 = vmatprep.subr.mxu0 0.0
  %616 = vmatpush1.msra.mxu0 0.0
  %617 = vmatprep.subr.mxu0 0.0
  %618 = vmatpush1.msra.mxu0 0.0
  %619 = vmatprep.subr.mxu0 0.0
  %620 = vmatpush1.msra.mxu0 0.0
  %621 = vmatprep.subr.mxu0 0.0
  %622 = vmatpush1.msra.mxu0 0.0
  %623 = vmatprep.subr.mxu0 0.0
  %624 = vmatpush1.msra.mxu0 0.0
  %625 = vmatprep.subr.mxu0 0.0
  %626 = vmatpush1.msra.mxu0 0.0
  %627 = vmatprep.subr.mxu0 0.0
  %628 = vmatpush1.msra.mxu0 0.0
  %629 = vmatprep.subr.mxu0 0.0
  %630 = vmatpush1.msra.mxu0 0.0
  %631 = vmatprep.subr.mxu0 0.0
  %632 = vmatpush1.msra.mxu0 0.0
  %633 = vmatprep.subr.mxu0 0.0
  %634 = vmatpush1.msra.mxu0 0.0
  %635 = vmatprep.subr.mxu0 0.0
  %636 = vmatpush1.msra.mxu0 0.0
  %637 = vmatprep.mubr.f32.mxu0 0.0
  %638 = vmatmul.mubr.f32.gmra.mrb[0].mxu0 %v571
  %v639 = vpop.f32.mrb[0].mxu0
  %v640 = vadd.f32 0.0, %v639
  %v641 = vpop.f32.mrb[0].mxu0
  %v642 = vadd.f32 0.0, %v641
  %643 = vdwg.mxu0
  %644 = vmatprep.subr.mxu0 %v551
  %645 = vmatpush1.msra.mxu0 %v550
  %646 = vmatprep.subr.mxu0 %v535
  %647 = vmatpush1.msra.mxu0 %v534
  %648 = vmatprep.subr.mxu0 %v567
  %649 = vmatpush1.msra.mxu0 %v566
  %650 = vmatprep.subr.mxu0 0.0
  %651 = vmatpush1.msra.mxu0 0.0
  %652 = vmatprep.subr.mxu0 0.0
  %653 = vmatpush1.msra.mxu0 0.0
  %654 = vmatprep.subr.mxu0 0.0
  %655 = vmatpush1.msra.mxu0 0.0
  %656 = vmatprep.subr.mxu0 0.0
  %657 = vmatpush1.msra.mxu0 0.0
  %658 = vmatprep.subr.mxu0 0.0
  %659 = vmatpush1.msra.mxu0 0.0
  %660 = vmatprep.subr.mxu0 0.0
  %661 = vmatpush1.msra.mxu0 0.0
  %662 = vmatprep.subr.mxu0 0.0
  %663 = vmatpush1.msra.mxu0 0.0
  %664 = vmatprep.subr.mxu0 0.0
  %665 = vmatpush1.msra.mxu0 0.0
  %666 = vmatprep.subr.mxu0 0.0
  %667 = vmatpush1.msra.mxu0 0.0
  %668 = vmatprep.subr.mxu0 0.0
  %669 = vmatpush1.msra.mxu0 0.0
  %670 = vmatprep.subr.mxu0 0.0
  %671 = vmatpush1.msra.mxu0 0.0
  %672 = vmatprep.subr.mxu0 0.0
  %673 = vmatpush1.msra.mxu0 0.0
  %674 = vmatprep.subr.mxu0 0.0
  %675 = vmatpush1.msra.mxu0 0.0
  %676 = vmatprep.subr.mxu0 0.0
  %677 = vmatpush1.msra.mxu0 0.0
  %678 = vmatprep.subr.mxu0 0.0
  %679 = vmatpush1.msra.mxu0 0.0
  %680 = vmatprep.subr.mxu0 0.0
  %681 = vmatpush1.msra.mxu0 0.0
  %682 = vmatprep.subr.mxu0 0.0
  %683 = vmatpush1.msra.mxu0 0.0
  %684 = vmatprep.subr.mxu0 0.0
  %685 = vmatpush1.msra.mxu0 0.0
  %686 = vmatprep.subr.mxu0 0.0
  %687 = vmatpush1.msra.mxu0 0.0
  %688 = vmatprep.subr.mxu0 0.0
  %689 = vmatpush1.msra.mxu0 0.0
  %690 = vmatprep.subr.mxu0 0.0
  %691 = vmatpush1.msra.mxu0 0.0
  %692 = vmatprep.subr.mxu0 0.0
  %693 = vmatpush1.msra.mxu0 0.0
  %694 = vmatprep.subr.mxu0 0.0
  %695 = vmatpush1.msra.mxu0 0.0
  %696 = vmatprep.subr.mxu0 0.0
  %697 = vmatpush1.msra.mxu0 0.0
  %698 = vmatprep.subr.mxu0 0.0
  %699 = vmatpush1.msra.mxu0 0.0
  %700 = vmatprep.subr.mxu0 0.0
  %701 = vmatpush1.msra.mxu0 0.0
  %702 = vmatprep.subr.mxu0 0.0
  %703 = vmatpush1.msra.mxu0 0.0
  %704 = vmatprep.subr.mxu0 0.0
  %705 = vmatpush1.msra.mxu0 0.0
  %706 = vmatprep.subr.mxu0 0.0
  %707 = vmatpush1.msra.mxu0 0.0
  %708 = vmatprep.mubr.f32.mxu0 0.0
  %709 = vmatmul.mubr.f32.gmra.mrb[0].mxu0 %v571
  %v710 = vpop.f32.mrb[0].mxu0
  %v711 = vadd.f32 0.0, %v710
  %v712 = vpop.f32.mrb[0].mxu0
  %v713 = vadd.f32 0.0, %v712
  %714 = vdwg.mxu0
  %v715 = vadd.f32 %v444, %v640
  %v716 = vadd.f32 %v446, %v642
  %v717 = vadd.f32 %v515, %v711
  %v718 = vadd.f32 %v517, %v713
  %720 = vset.pattern.permute.xlu0 0
  %721 = vperm.xlu0 %720, %v20
  %v722 = vpop.permute.xlu0 %721
  %v724 = vadd.f32 %v715, %v722
  %v725 = vadd.f32 %v716, %v722
  %v726 = vadd.f32 %v717, %v722
  %v727 = vadd.f32 %v718, %v722
  %vm728 = vcmp.ge.f32.partialorder %v724, 0.0
  %vm729 = vcmp.ge.f32.partialorder %v725, 0.0
  %vm730 = vcmp.ge.f32.partialorder %v726, 0.0
  %vm731 = vcmp.ge.f32.partialorder %v727, 0.0
  %732 = vset.pattern.permute.xlu0 1
  %733 = vperm.xlu0 %732, %v20
  %v734 = vpop.permute.xlu0 %733
  %v736 = vmul.f32 %v734, %v724
  %v737 = vmul.f32 %v734, %v725
  %v738 = vmul.f32 %v734, %v726
  %v739 = vmul.f32 %v734, %v727
  %v740 = vsel %vm728, %v724, %v736
  %v741 = vsel %vm729, %v725, %v737
  %v742 = vsel %vm730, %v726, %v738
  %v743 = vsel %vm731, %v727, %v739
  %744 = vst [vmem:[%s5] sm:$0xff] %v740
  %745 = vst [vmem:[%s5 + $0x8] sm:$0xff] %v741
  %746 = vst [vmem:[%s5 + $0x10] sm:$0xff] %v742
  %747 = vst [vmem:[%s5 + $0x18] sm:$0xff] %v743
  %748 = vrot.lane.b32.xlu0 %v740, 16
  %v749 = vpop.permute.xlu0 %748
  %750 = vrot.lane.b32.xlu0 %v741, 16
  %v751 = vpop.permute.xlu0 %750
  %752 = vrot.lane.b32.xlu0 %v742, 16
  %v753 = vpop.permute.xlu0 %752
  %754 = vrot.lane.b32.xlu0 %v743, 16
  %v755 = vpop.permute.xlu0 %754
  %v756 = vsel %vm150, %v753, %v755
  %v757 = vsel %vm150, %v751, %v753
  %v758 = vsel %vm150, %v749, %v751
  %v759 = vsel %vm150, %v755, %v749
  %v760 = vsel %vm126, %v759, 0.0
  %v761 = vsel %vm127, %v758, 0.0
  %v762 = vsel %vm128, %v757, 0.0
  %v763 = vsel %vm129, %v756, 0.0
  %764 = vrot.lane.b32.xlu0 %v760, 1
  %v765 = vpop.permute.xlu0 %764
  %766 = vrot.lane.b32.xlu0 %v761, 1
  %v767 = vpop.permute.xlu0 %766
  %768 = vrot.lane.b32.xlu0 %v762, 1
  %v769 = vpop.permute.xlu0 %768
  %770 = vrot.lane.b32.xlu0 %v763, 1
  %v771 = vpop.permute.xlu0 %770
  %v772 = vsel %vm167, %v769, %v771
  %v773 = vsel %vm167, %v767, %v769
  %v774 = vsel %vm167, %v765, %v767
  %v775 = vsel %vm167, %v771, %v765
  %v776 = vsel %vm134, %v775, 0.0
  %v777 = vsel %vm135, %v774, 0.0
  %v778 = vsel %vm136, %v773, 0.0
  %v779 = vsel %vm137, %v772, 0.0
  %780 = vrot.lane.b32.xlu0 %v760, 127
  %v781 = vpop.permute.xlu0 %780
  %782 = vrot.lane.b32.xlu0 %v761, 127
  %v783 = vpop.permute.xlu0 %782
  %784 = vrot.lane.b32.xlu0 %v762, 127
  %v785 = vpop.permute.xlu0 %784
  %786 = vrot.lane.b32.xlu0 %v763, 127
  %v787 = vpop.permute.xlu0 %786
  %v788 = vsel %vm184, %v785, %v787
  %v789 = vsel %vm184, %v783, %v785
  %v790 = vsel %vm184, %v781, %v783
  %v791 = vsel %vm184, %v787, %v781
  %v792 = vsel %vm138, %v790, 0.0
  %v793 = vsel %vm139, %v789, 0.0
  %v794 = vsel %vm140, %v788, 0.0
  %v795 = vsel %vm141, %v791, 0.0
  %v796 = vld [vmem:[%s2] sm:$0xff]
  %797 = vrot.lane.b32.xlu0 %v740, 1
  %v798 = vpop.permute.xlu0 %797
  %799 = vrot.lane.b32.xlu0 %v741, 1
  %v800 = vpop.permute.xlu0 %799
  %801 = vrot.lane.b32.xlu0 %v742, 1
  %v802 = vpop.permute.xlu0 %801
  %803 = vrot.lane.b32.xlu0 %v743, 1
  %v804 = vpop.permute.xlu0 %803
  %v805 = vsel %vm167, %v802, %v804
  %v806 = vsel %vm167, %v800, %v802
  %v807 = vsel %vm167, %v798, %v800
  %v808 = vsel %vm167, %v804, %v798
  %v809 = vsel %vm134, %v808, 0.0
  %v810 = vsel %vm135, %v807, 0.0
  %v811 = vsel %vm136, %v806, 0.0
  %v812 = vsel %vm137, %v805, 0.0
  %813 = vrot.lane.b32.xlu0 %v740, 127
  %v814 = vpop.permute.xlu0 %813
  %815 = vrot.lane.b32.xlu0 %v741, 127
  %v816 = vpop.permute.xlu0 %815
  %817 = vrot.lane.b32.xlu0 %v742, 127
  %v818 = vpop.permute.xlu0 %817
  %819 = vrot.lane.b32.xlu0 %v743, 127
  %v820 = vpop.permute.xlu0 %819
  %v821 = vsel %vm184, %v818, %v820
  %v822 = vsel %vm184, %v816, %v818
  %v823 = vsel %vm184, %v814, %v816
  %v824 = vsel %vm184, %v820, %v814
  %v825 = vsel %vm138, %v823, 0.0
  %v826 = vsel %vm139, %v822, 0.0
  %v827 = vsel %vm140, %v821, 0.0
  %v828 = vsel %vm141, %v824, 0.0
  %s829 = scalar_lea.vmem %s2, 8
  %v830 = vld [vmem:[%s829] sm:$0xff]
  %v832 = vsel %vm228, %v830, 0
  %834 = vmatprep.subr.mxu0 %v810
  %835 = vmatpush1.msra.mxu0 %v809
  %836 = vmatprep.subr.mxu0 %v741
  %837 = vmatpush1.msra.mxu0 %v740
  %838 = vmatprep.subr.mxu0 %v826
  %839 = vmatpush1.msra.mxu0 %v825
  %840 = vmatprep.subr.mxu0 0.0
  %841 = vmatpush1.msra.mxu0 0.0
  %842 = vmatprep.subr.mxu0 0.0
  %843 = vmatpush1.msra.mxu0 0.0
  %844 = vmatprep.subr.mxu0 0.0
  %845 = vmatpush1.msra.mxu0 0.0
  %846 = vmatprep.subr.mxu0 0.0
  %847 = vmatpush1.msra.mxu0 0.0
  %848 = vmatprep.subr.mxu0 0.0
  %849 = vmatpush1.msra.mxu0 0.0
  %850 = vmatprep.subr.mxu0 0.0
  %851 = vmatpush1.msra.mxu0 0.0
  %852 = vmatprep.subr.mxu0 0.0
  %853 = vmatpush1.msra.mxu0 0.0
  %854 = vmatprep.subr.mxu0 0.0
  %855 = vmatpush1.msra.mxu0 0.0
  %856 = vmatprep.subr.mxu0 0.0
  %857 = vmatpush1.msra.mxu0 0.0
  %858 = vmatprep.subr.mxu0 0.0
  %859 = vmatpush1.msra.mxu0 0.0
  %860 = vmatprep.subr.mxu0 0.0
  %861 = vmatpush1.msra.mxu0 0.0
  %862 = vmatprep.subr.mxu0 0.0
  %863 = vmatpush1.msra.mxu0 0.0
  %864 = vmatprep.subr.mxu0 0.0
  %865 = vmatpush1.msra.mxu0 0.0
  %866 = vmatprep.subr.mxu0 0.0
  %867 = vmatpush1.msra.mxu0 0.0
  %868 = vmatprep.subr.mxu0 0.0
  %869 = vmatpush1.msra.mxu0 0.0
  %870 = vmatprep.subr.mxu0 0.0
  %871 = vmatpush1.msra.mxu0 0.0
  %872 = vmatprep.subr.mxu0 0.0
  %873 = vmatpush1.msra.mxu0 0.0
  %874 = vmatprep.subr.mxu0 0.0
  %875 = vmatpush1.msra.mxu0 0.0
  %876 = vmatprep.subr.mxu0 0.0
  %877 = vmatpush1.msra.mxu0 0.0
  %878 = vmatprep.subr.mxu0 0.0
  %879 = vmatpush1.msra.mxu0 0.0
  %880 = vmatprep.subr.mxu0 0.0
  %881 = vmatpush1.msra.mxu0 0.0
  %882 = vmatprep.subr.mxu0 0.0
  %883 = vmatpush1.msra.mxu0 0.0
  %884 = vmatprep.subr.mxu0 0.0
  %885 = vmatpush1.msra.mxu0 0.0
  %886 = vmatprep.subr.mxu0 0.0
  %887 = vmatpush1.msra.mxu0 0.0
  %888 = vmatprep.subr.mxu0 0.0
  %889 = vmatpush1.msra.mxu0 0.0
  %890 = vmatprep.subr.mxu0 0.0
  %891 = vmatpush1.msra.mxu0 0.0
  %892 = vmatprep.subr.mxu0 0.0
  %893 = vmatpush1.msra.mxu0 0.0
  %894 = vmatprep.subr.mxu0 0.0
  %895 = vmatpush1.msra.mxu0 0.0
  %896 = vmatprep.subr.mxu0 0.0
  %897 = vmatpush1.msra.mxu0 0.0
  %898 = vmatprep.mubr.f32.mxu0 0.0
  %899 = vmatmul.mubr.f32.gmra.mrb[0].mxu0 %v832
  %v900 = vpop.f32.mrb[0].mxu0
  %v901 = vadd.f32 0.0, %v900
  %v902 = vpop.f32.mrb[0].mxu0
  %v903 = vadd.f32 0.0, %v902
  %904 = vdwg.mxu0
  %905 = vmatprep.subr.mxu0 %v812
  %906 = vmatpush1.msra.mxu0 %v811
  %907 = vmatprep.subr.mxu0 %v743
  %908 = vmatpush1.msra.mxu0 %v742
  %909 = vmatprep.subr.mxu0 %v828
  %910 = vmatpush1.msra.mxu0 %v827
  %911 = vmatprep.subr.mxu0 0.0
  %912 = vmatpush1.msra.mxu0 0.0
  %913 = vmatprep.subr.mxu0 0.0
  %914 = vmatpush1.msra.mxu0 0.0
  %915 = vmatprep.subr.mxu0 0.0
  %916 = vmatpush1.msra.mxu0 0.0
  %917 = vmatprep.subr.mxu0 0.0
  %918 = vmatpush1.msra.mxu0 0.0
  %919 = vmatprep.subr.mxu0 0.0
  %920 = vmatpush1.msra.mxu0 0.0
  %921 = vmatprep.subr.mxu0 0.0
  %922 = vmatpush1.msra.mxu0 0.0
  %923 = vmatprep.subr.mxu0 0.0
  %924 = vmatpush1.msra.mxu0 0.0
  %925 = vmatprep.subr.mxu0 0.0
  %926 = vmatpush1.msra.mxu0 0.0
  %927 = vmatprep.subr.mxu0 0.0
  %928 = vmatpush1.msra.mxu0 0.0
  %929 = vmatprep.subr.mxu0 0.0
  %930 = vmatpush1.msra.mxu0 0.0
  %931 = vmatprep.subr.mxu0 0.0
  %932 = vmatpush1.msra.mxu0 0.0
  %933 = vmatprep.subr.mxu0 0.0
  %934 = vmatpush1.msra.mxu0 0.0
  %935 = vmatprep.subr.mxu0 0.0
  %936 = vmatpush1.msra.mxu0 0.0
  %937 = vmatprep.subr.mxu0 0.0
  %938 = vmatpush1.msra.mxu0 0.0
  %939 = vmatprep.subr.mxu0 0.0
  %940 = vmatpush1.msra.mxu0 0.0
  %941 = vmatprep.subr.mxu0 0.0
  %942 = vmatpush1.msra.mxu0 0.0
  %943 = vmatprep.subr.mxu0 0.0
  %944 = vmatpush1.msra.mxu0 0.0
  %945 = vmatprep.subr.mxu0 0.0
  %946 = vmatpush1.msra.mxu0 0.0
  %947 = vmatprep.subr.mxu0 0.0
  %948 = vmatpush1.msra.mxu0 0.0
  %949 = vmatprep.subr.mxu0 0.0
  %950 = vmatpush1.msra.mxu0 0.0
  %951 = vmatprep.subr.mxu0 0.0
  %952 = vmatpush1.msra.mxu0 0.0
  %953 = vmatprep.subr.mxu0 0.0
  %954 = vmatpush1.msra.mxu0 0.0
  %955 = vmatprep.subr.mxu0 0.0
  %956 = vmatpush1.msra.mxu0 0.0
  %957 = vmatprep.subr.mxu0 0.0
  %958 = vmatpush1.msra.mxu0 0.0
  %959 = vmatprep.subr.mxu0 0.0
  %960 = vmatpush1.msra.mxu0 0.0
  %961 = vmatprep.subr.mxu0 0.0
  %962 = vmatpush1.msra.mxu0 0.0
  %963 = vmatprep.subr.mxu0 0.0
  %964 = vmatpush1.msra.mxu0 0.0
  %965 = vmatprep.subr.mxu0 0.0
  %966 = vmatpush1.msra.mxu0 0.0
  %967 = vmatprep.subr.mxu0 0.0
  %968 = vmatpush1.msra.mxu0 0.0
  %969 = vmatprep.mubr.f32.mxu0 0.0
  %970 = vmatmul.mubr.f32.gmra.mrb[0].mxu0 %v832
  %v971 = vpop.f32.mrb[0].mxu0
  %v972 = vadd.f32 0.0, %v971
  %v973 = vpop.f32.mrb[0].mxu0
  %v974 = vadd.f32 0.0, %v973
  %975 = vdwg.mxu0
  %v977 = vsel %vm228, %v796, 0
  %979 = vmatprep.subr.mxu0 %v777
  %980 = vmatpush1.msra.mxu0 %v776
  %981 = vmatprep.subr.mxu0 %v761
  %982 = vmatpush1.msra.mxu0 %v760
  %983 = vmatprep.subr.mxu0 %v793
  %984 = vmatpush1.msra.mxu0 %v792
  %985 = vmatprep.subr.mxu0 0.0
  %986 = vmatpush1.msra.mxu0 0.0
  %987 = vmatprep.subr.mxu0 0.0
  %988 = vmatpush1.msra.mxu0 0.0
  %989 = vmatprep.subr.mxu0 0.0
  %990 = vmatpush1.msra.mxu0 0.0
  %991 = vmatprep.subr.mxu0 0.0
  %992 = vmatpush1.msra.mxu0 0.0
  %993 = vmatprep.subr.mxu0 0.0
  %994 = vmatpush1.msra.mxu0 0.0
  %995 = vmatprep.subr.mxu0 0.0
  %996 = vmatpush1.msra.mxu0 0.0
  %997 = vmatprep.subr.mxu0 0.0
  %998 = vmatpush1.msra.mxu0 0.0
  %999 = vmatprep.subr.mxu0 0.0
  %1000 = vmatpush1.msra.mxu0 0.0
  %1001 = vmatprep.subr.mxu0 0.0
  %1002 = vmatpush1.msra.mxu0 0.0
  %1003 = vmatprep.subr.mxu0 0.0
  %1004 = vmatpush1.msra.mxu0 0.0
  %1005 = vmatprep.subr.mxu0 0.0
  %1006 = vmatpush1.msra.mxu0 0.0
  %1007 = vmatprep.subr.mxu0 0.0
  %1008 = vmatpush1.msra.mxu0 0.0
  %1009 = vmatprep.subr.mxu0 0.0
  %1010 = vmatpush1.msra.mxu0 0.0
  %1011 = vmatprep.subr.mxu0 0.0
  %1012 = vmatpush1.msra.mxu0 0.0
  %1013 = vmatprep.subr.mxu0 0.0
  %1014 = vmatpush1.msra.mxu0 0.0
  %1015 = vmatprep.subr.mxu0 0.0
  %1016 = vmatpush1.msra.mxu0 0.0
  %1017 = vmatprep.subr.mxu0 0.0
  %1018 = vmatpush1.msra.mxu0 0.0
  %1019 = vmatprep.subr.mxu0 0.0
  %1020 = vmatpush1.msra.mxu0 0.0
  %1021 = vmatprep.subr.mxu0 0.0
  %1022 = vmatpush1.msra.mxu0 0.0
  %1023 = vmatprep.subr.mxu0 0.0
  %1024 = vmatpush1.msra.mxu0 0.0
  %1025 = vmatprep.subr.mxu0 0.0
  %1026 = vmatpush1.msra.mxu0 0.0
  %1027 = vmatprep.subr.mxu0 0.0
  %1028 = vmatpush1.msra.mxu0 0.0
  %1029 = vmatprep.subr.mxu0 0.0
  %1030 = vmatpush1.msra.mxu0 0.0
  %1031 = vmatprep.subr.mxu0 0.0
  %1032 = vmatpush1.msra.mxu0 0.0
  %1033 = vmatprep.subr.mxu0 0.0
  %1034 = vmatpush1.msra.mxu0 0.0
  %1035 = vmatprep.subr.mxu0 0.0
  %1036 = vmatpush1.msra.mxu0 0.0
  %1037 = vmatprep.subr.mxu0 0.0
  %1038 = vmatpush1.msra.mxu0 0.0
  %1039 = vmatprep.subr.mxu0 0.0
  %1040 = vmatpush1.msra.mxu0 0.0
  %1041 = vmatprep.subr.mxu0 0.0
  %1042 = vmatpush1.msra.mxu0 0.0
  %1043 = vmatprep.mubr.f32.mxu0 0.0
  %1044 = vmatmul.mubr.f32.gmra.mrb[0].mxu0 %v977
  %v1045 = vpop.f32.mrb[0].mxu0
  %v1046 = vadd.f32 %v901, %v1045
  %v1047 = vpop.f32.mrb[0].mxu0
  %v1048 = vadd.f32 %v903, %v1047
  %1049 = vdwg.mxu0
  %1050 = vmatprep.subr.mxu0 %v779
  %1051 = vmatpush1.msra.mxu0 %v778
  %1052 = vmatprep.subr.mxu0 %v763
  %1053 = vmatpush1.msra.mxu0 %v762
  %1054 = vmatprep.subr.mxu0 %v795
  %1055 = vmatpush1.msra.mxu0 %v794
  %1056 = vmatprep.subr.mxu0 0.0
  %1057 = vmatpush1.msra.mxu0 0.0
  %1058 = vmatprep.subr.mxu0 0.0
  %1059 = vmatpush1.msra.mxu0 0.0
  %1060 = vmatprep.subr.mxu0 0.0
  %1061 = vmatpush1.msra.mxu0 0.0
  %1062 = vmatprep.subr.mxu0 0.0
  %1063 = vmatpush1.msra.mxu0 0.0
  %1064 = vmatprep.subr.mxu0 0.0
  %1065 = vmatpush1.msra.mxu0 0.0
  %1066 = vmatprep.subr.mxu0 0.0
  %1067 = vmatpush1.msra.mxu0 0.0
  %1068 = vmatprep.subr.mxu0 0.0
  %1069 = vmatpush1.msra.mxu0 0.0
  %1070 = vmatprep.subr.mxu0 0.0
  %1071 = vmatpush1.msra.mxu0 0.0
  %1072 = vmatprep.subr.mxu0 0.0
  %1073 = vmatpush1.msra.mxu0 0.0
  %1074 = vmatprep.subr.mxu0 0.0
  %1075 = vmatpush1.msra.mxu0 0.0
  %1076 = vmatprep.subr.mxu0 0.0
  %1077 = vmatpush1.msra.mxu0 0.0
  %1078 = vmatprep.subr.mxu0 0.0
  %1079 = vmatpush1.msra.mxu0 0.0
  %1080 = vmatprep.subr.mxu0 0.0
  %1081 = vmatpush1.msra.mxu0 0.0
  %1082 = vmatprep.subr.mxu0 0.0
  %1083 = vmatpush1.msra.mxu0 0.0
  %1084 = vmatprep.subr.mxu0 0.0
  %1085 = vmatpush1.msra.mxu0 0.0
  %1086 = vmatprep.subr.mxu0 0.0
  %1087 = vmatpush1.msra.mxu0 0.0
  %1088 = vmatprep.subr.mxu0 0.0
  %1089 = vmatpush1.msra.mxu0 0.0
  %1090 = vmatprep.subr.mxu0 0.0
  %1091 = vmatpush1.msra.mxu0 0.0
  %1092 = vmatprep.subr.mxu0 0.0
  %1093 = vmatpush1.msra.mxu0 0.0
  %1094 = vmatprep.subr.mxu0 0.0
  %1095 = vmatpush1.msra.mxu0 0.0
  %1096 = vmatprep.subr.mxu0 0.0
  %1097 = vmatpush1.msra.mxu0 0.0
  %1098 = vmatprep.subr.mxu0 0.0
  %1099 = vmatpush1.msra.mxu0 0.0
  %1100 = vmatprep.subr.mxu0 0.0
  %1101 = vmatpush1.msra.mxu0 0.0
  %1102 = vmatprep.subr.mxu0 0.0
  %1103 = vmatpush1.msra.mxu0 0.0
  %1104 = vmatprep.subr.mxu0 0.0
  %1105 = vmatpush1.msra.mxu0 0.0
  %1106 = vmatprep.subr.mxu0 0.0
  %1107 = vmatpush1.msra.mxu0 0.0
  %1108 = vmatprep.subr.mxu0 0.0
  %1109 = vmatpush1.msra.mxu0 0.0
  %1110 = vmatprep.subr.mxu0 0.0
  %1111 = vmatpush1.msra.mxu0 0.0
  %1112 = vmatprep.subr.mxu0 0.0
  %1113 = vmatpush1.msra.mxu0 0.0
  %1114 = vmatprep.mubr.f32.mxu0 0.0
  %1115 = vmatmul.mubr.f32.gmra.mrb[0].mxu0 %v977
  %v1116 = vpop.f32.mrb[0].mxu0
  %v1117 = vadd.f32 %v972, %v1116
  %v1118 = vpop.f32.mrb[0].mxu0
  %v1119 = vadd.f32 %v974, %v1118
  %1120 = vdwg.mxu0
  %1121 = vrot.lane.b32.xlu0 %v740, 112
  %v1122 = vpop.permute.xlu0 %1121
  %1123 = vrot.lane.b32.xlu0 %v741, 112
  %v1124 = vpop.permute.xlu0 %1123
  %1125 = vrot.lane.b32.xlu0 %v742, 112
  %v1126 = vpop.permute.xlu0 %1125
  %1127 = vrot.lane.b32.xlu0 %v743, 112
  %v1128 = vpop.permute.xlu0 %1127
  %v1129 = vsel %vm527, %v1126, %v1128
  %v1130 = vsel %vm527, %v1124, %v1126
  %v1131 = vsel %vm527, %v1122, %v1124
  %v1132 = vsel %vm527, %v1128, %v1122
  %v1133 = vsel %vm130, %v1131, 0.0
  %v1134 = vsel %vm131, %v1130, 0.0
  %v1135 = vsel %vm132, %v1129, 0.0
  %v1136 = vsel %vm133, %v1132, 0.0
  %1137 = vrot.lane.b32.xlu0 %v1133, 1
  %v1138 = vpop.permute.xlu0 %1137
  %1139 = vrot.lane.b32.xlu0 %v1134, 1
  %v1140 = vpop.permute.xlu0 %1139
  %1141 = vrot.lane.b32.xlu0 %v1135, 1
  %v1142 = vpop.permute.xlu0 %1141
  %1143 = vrot.lane.b32.xlu0 %v1136, 1
  %v1144 = vpop.permute.xlu0 %1143
  %v1145 = vsel %vm167, %v1142, %v1144
  %v1146 = vsel %vm167, %v1140, %v1142
  %v1147 = vsel %vm167, %v1138, %v1140
  %v1148 = vsel %vm167, %v1144, %v1138
  %v1149 = vsel %vm134, %v1148, 0.0
  %v1150 = vsel %vm135, %v1147, 0.0
  %v1151 = vsel %vm136, %v1146, 0.0
  %v1152 = vsel %vm137, %v1145, 0.0
  %1153 = vrot.lane.b32.xlu0 %v1133, 127
  %v1154 = vpop.permute.xlu0 %1153
  %1155 = vrot.lane.b32.xlu0 %v1134, 127
  %v1156 = vpop.permute.xlu0 %1155
  %1157 = vrot.lane.b32.xlu0 %v1135, 127
  %v1158 = vpop.permute.xlu0 %1157
  %1159 = vrot.lane.b32.xlu0 %v1136, 127
  %v1160 = vpop.permute.xlu0 %1159
  %v1161 = vsel %vm184, %v1158, %v1160
  %v1162 = vsel %vm184, %v1156, %v1158
  %v1163 = vsel %vm184, %v1154, %v1156
  %v1164 = vsel %vm184, %v1160, %v1154
  %v1165 = vsel %vm138, %v1163, 0.0
  %v1166 = vsel %vm139, %v1162, 0.0
  %v1167 = vsel %vm140, %v1161, 0.0
  %v1168 = vsel %vm141, %v1164, 0.0
  %s1169 = scalar_lea.vmem %s2, 16
  %v1170 = vld [vmem:[%s1169] sm:$0xff]
  %v1172 = vsel %vm228, %v1170, 0
  %1174 = vmatprep.subr.mxu0 %v1150
  %1175 = vmatpush1.msra.mxu0 %v1149
  %1176 = vmatprep.subr.mxu0 %v1134
  %1177 = vmatpush1.msra.mxu0 %v1133
  %1178 = vmatprep.subr.mxu0 %v1166
  %1179 = vmatpush1.msra.mxu0 %v1165
  %1180 = vmatprep.subr.mxu0 0.0
  %1181 = vmatpush1.msra.mxu0 0.0
  %1182 = vmatprep.subr.mxu0 0.0
  %1183 = vmatpush1.msra.mxu0 0.0
  %1184 = vmatprep.subr.mxu0 0.0
  %1185 = vmatpush1.msra.mxu0 0.0
  %1186 = vmatprep.subr.mxu0 0.0
  %1187 = vmatpush1.msra.mxu0 0.0
  %1188 = vmatprep.subr.mxu0 0.0
  %1189 = vmatpush1.msra.mxu0 0.0
  %1190 = vmatprep.subr.mxu0 0.0
  %1191 = vmatpush1.msra.mxu0 0.0
  %1192 = vmatprep.subr.mxu0 0.0
  %1193 = vmatpush1.msra.mxu0 0.0
  %1194 = vmatprep.subr.mxu0 0.0
  %1195 = vmatpush1.msra.mxu0 0.0
  %1196 = vmatprep.subr.mxu0 0.0
  %1197 = vmatpush1.msra.mxu0 0.0
  %1198 = vmatprep.subr.mxu0 0.0
  %1199 = vmatpush1.msra.mxu0 0.0
  %1200 = vmatprep.subr.mxu0 0.0
  %1201 = vmatpush1.msra.mxu0 0.0
  %1202 = vmatprep.subr.mxu0 0.0
  %1203 = vmatpush1.msra.mxu0 0.0
  %1204 = vmatprep.subr.mxu0 0.0
  %1205 = vmatpush1.msra.mxu0 0.0
  %1206 = vmatprep.subr.mxu0 0.0
  %1207 = vmatpush1.msra.mxu0 0.0
  %1208 = vmatprep.subr.mxu0 0.0
  %1209 = vmatpush1.msra.mxu0 0.0
  %1210 = vmatprep.subr.mxu0 0.0
  %1211 = vmatpush1.msra.mxu0 0.0
  %1212 = vmatprep.subr.mxu0 0.0
  %1213 = vmatpush1.msra.mxu0 0.0
  %1214 = vmatprep.subr.mxu0 0.0
  %1215 = vmatpush1.msra.mxu0 0.0
  %1216 = vmatprep.subr.mxu0 0.0
  %1217 = vmatpush1.msra.mxu0 0.0
  %1218 = vmatprep.subr.mxu0 0.0
  %1219 = vmatpush1.msra.mxu0 0.0
  %1220 = vmatprep.subr.mxu0 0.0
  %1221 = vmatpush1.msra.mxu0 0.0
  %1222 = vmatprep.subr.mxu0 0.0
  %1223 = vmatpush1.msra.mxu0 0.0
  %1224 = vmatprep.subr.mxu0 0.0
  %1225 = vmatpush1.msra.mxu0 0.0
  %1226 = vmatprep.subr.mxu0 0.0
  %1227 = vmatpush1.msra.mxu0 0.0
  %1228 = vmatprep.subr.mxu0 0.0
  %1229 = vmatpush1.msra.mxu0 0.0
  %1230 = vmatprep.subr.mxu0 0.0
  %1231 = vmatpush1.msra.mxu0 0.0
  %1232 = vmatprep.subr.mxu0 0.0
  %1233 = vmatpush1.msra.mxu0 0.0
  %1234 = vmatprep.subr.mxu0 0.0
  %1235 = vmatpush1.msra.mxu0 0.0
  %1236 = vmatprep.subr.mxu0 0.0
  %1237 = vmatpush1.msra.mxu0 0.0
  %1238 = vmatprep.mubr.f32.mxu0 0.0
  %1239 = vmatmul.mubr.f32.gmra.mrb[0].mxu0 %v1172
  %v1240 = vpop.f32.mrb[0].mxu0
  %v1241 = vadd.f32 0.0, %v1240
  %v1242 = vpop.f32.mrb[0].mxu0
  %v1243 = vadd.f32 0.0, %v1242
  %1244 = vdwg.mxu0
  %1245 = vmatprep.subr.mxu0 %v1152
  %1246 = vmatpush1.msra.mxu0 %v1151
  %1247 = vmatprep.subr.mxu0 %v1136
  %1248 = vmatpush1.msra.mxu0 %v1135
  %1249 = vmatprep.subr.mxu0 %v1168
  %1250 = vmatpush1.msra.mxu0 %v1167
  %1251 = vmatprep.subr.mxu0 0.0
  %1252 = vmatpush1.msra.mxu0 0.0
  %1253 = vmatprep.subr.mxu0 0.0
  %1254 = vmatpush1.msra.mxu0 0.0
  %1255 = vmatprep.subr.mxu0 0.0
  %1256 = vmatpush1.msra.mxu0 0.0
  %1257 = vmatprep.subr.mxu0 0.0
  %1258 = vmatpush1.msra.mxu0 0.0
  %1259 = vmatprep.subr.mxu0 0.0
  %1260 = vmatpush1.msra.mxu0 0.0
  %1261 = vmatprep.subr.mxu0 0.0
  %1262 = vmatpush1.msra.mxu0 0.0
  %1263 = vmatprep.subr.mxu0 0.0
  %1264 = vmatpush1.msra.mxu0 0.0
  %1265 = vmatprep.subr.mxu0 0.0
  %1266 = vmatpush1.msra.mxu0 0.0
  %1267 = vmatprep.subr.mxu0 0.0
  %1268 = vmatpush1.msra.mxu0 0.0
  %1269 = vmatprep.subr.mxu0 0.0
  %1270 = vmatpush1.msra.mxu0 0.0
  %1271 = vmatprep.subr.mxu0 0.0
  %1272 = vmatpush1.msra.mxu0 0.0
  %1273 = vmatprep.subr.mxu0 0.0
  %1274 = vmatpush1.msra.mxu0 0.0
  %1275 = vmatprep.subr.mxu0 0.0
  %1276 = vmatpush1.msra.mxu0 0.0
  %1277 = vmatprep.subr.mxu0 0.0
  %1278 = vmatpush1.msra.mxu0 0.0
  %1279 = vmatprep.subr.mxu0 0.0
  %1280 = vmatpush1.msra.mxu0 0.0
  %1281 = vmatprep.subr.mxu0 0.0
  %1282 = vmatpush1.msra.mxu0 0.0
  %1283 = vmatprep.subr.mxu0 0.0
  %1284 = vmatpush1.msra.mxu0 0.0
  %1285 = vmatprep.subr.mxu0 0.0
  %1286 = vmatpush1.msra.mxu0 0.0
  %1287 = vmatprep.subr.mxu0 0.0
  %1288 = vmatpush1.msra.mxu0 0.0
  %1289 = vmatprep.subr.mxu0 0.0
  %1290 = vmatpush1.msra.mxu0 0.0
  %1291 = vmatprep.subr.mxu0 0.0
  %1292 = vmatpush1.msra.mxu0 0.0
  %1293 = vmatprep.subr.mxu0 0.0
  %1294 = vmatpush1.msra.mxu0 0.0
  %1295 = vmatprep.subr.mxu0 0.0
  %1296 = vmatpush1.msra.mxu0 0.0
  %1297 = vmatprep.subr.mxu0 0.0
  %1298 = vmatpush1.msra.mxu0 0.0
  %1299 = vmatprep.subr.mxu0 0.0
  %1300 = vmatpush1.msra.mxu0 0.0
  %1301 = vmatprep.subr.mxu0 0.0
  %1302 = vmatpush1.msra.mxu0 0.0
  %1303 = vmatprep.subr.mxu0 0.0
  %1304 = vmatpush1.msra.mxu0 0.0
  %1305 = vmatprep.subr.mxu0 0.0
  %1306 = vmatpush1.msra.mxu0 0.0
  %1307 = vmatprep.subr.mxu0 0.0
  %1308 = vmatpush1.msra.mxu0 0.0
  %1309 = vmatprep.mubr.f32.mxu0 0.0
  %1310 = vmatmul.mubr.f32.gmra.mrb[0].mxu0 %v1172
  %v1311 = vpop.f32.mrb[0].mxu0
  %v1312 = vadd.f32 0.0, %v1311
  %v1313 = vpop.f32.mrb[0].mxu0
  %v1314 = vadd.f32 0.0, %v1313
  %1315 = vdwg.mxu0
  %v1316 = vadd.f32 %v1046, %v1241
  %v1317 = vadd.f32 %v1048, %v1243
  %v1318 = vadd.f32 %v1117, %v1312
  %v1319 = vadd.f32 %v1119, %v1314
  %1320 = vset.pattern.permute.xlu0 2
  %1321 = vperm.xlu0 %1320, %v20
  %v1322 = vpop.permute.xlu0 %1321
  %v1324 = vadd.f32 %v1316, %v1322
  %v1325 = vadd.f32 %v1317, %v1322
  %v1326 = vadd.f32 %v1318, %v1322
  %v1327 = vadd.f32 %v1319, %v1322
  %vm1328 = vcmp.ge.f32.partialorder %v1324, 0.0
  %vm1329 = vcmp.ge.f32.partialorder %v1325, 0.0
  %vm1330 = vcmp.ge.f32.partialorder %v1326, 0.0
  %vm1331 = vcmp.ge.f32.partialorder %v1327, 0.0
  %1332 = vset.pattern.permute.xlu0 3
  %1333 = vperm.xlu0 %1332, %v20
  %v1334 = vpop.permute.xlu0 %1333
  %v1336 = vmul.f32 %v1334, %v1324
  %v1337 = vmul.f32 %v1334, %v1325
  %v1338 = vmul.f32 %v1334, %v1326
  %v1339 = vmul.f32 %v1334, %v1327
  %v1340 = vsel %vm1328, %v1324, %v1336
  %v1341 = vsel %vm1329, %v1325, %v1337
  %v1342 = vsel %vm1330, %v1326, %v1338
  %v1343 = vsel %vm1331, %v1327, %v1339
  %1344 = vst [vmem:[%s5 + $0x20] sm:$0xff] %v1340
  %1345 = vst [vmem:[%s5 + $0x28] sm:$0xff] %v1341
  %1346 = vst [vmem:[%s5 + $0x30] sm:$0xff] %v1342
  %1347 = vst [vmem:[%s5 + $0x38] sm:$0xff] %v1343
  %1348 = vrot.lane.b32.xlu0 %v1340, 16
  %v1349 = vpop.permute.xlu0 %1348
  %1350 = vrot.lane.b32.xlu0 %v1341, 16
  %v1351 = vpop.permute.xlu0 %1350
  %1352 = vrot.lane.b32.xlu0 %v1342, 16
  %v1353 = vpop.permute.xlu0 %1352
  %1354 = vrot.lane.b32.xlu0 %v1343, 16
  %v1355 = vpop.permute.xlu0 %1354
  %v1356 = vsel %vm150, %v1353, %v1355
  %v1357 = vsel %vm150, %v1351, %v1353
  %v1358 = vsel %vm150, %v1349, %v1351
  %v1359 = vsel %vm150, %v1355, %v1349
  %v1360 = vsel %vm126, %v1359, 0.0
  %v1361 = vsel %vm127, %v1358, 0.0
  %v1362 = vsel %vm128, %v1357, 0.0
  %v1363 = vsel %vm129, %v1356, 0.0
  %1364 = vrot.lane.b32.xlu0 %v1360, 1
  %v1365 = vpop.permute.xlu0 %1364
  %1366 = vrot.lane.b32.xlu0 %v1361, 1
  %v1367 = vpop.permute.xlu0 %1366
  %1368 = vrot.lane.b32.xlu0 %v1362, 1
  %v1369 = vpop.permute.xlu0 %1368
  %1370 = vrot.lane.b32.xlu0 %v1363, 1
  %v1371 = vpop.permute.xlu0 %1370
  %v1372 = vsel %vm167, %v1369, %v1371
  %v1373 = vsel %vm167, %v1367, %v1369
  %v1374 = vsel %vm167, %v1365, %v1367
  %v1375 = vsel %vm167, %v1371, %v1365
  %v1376 = vsel %vm134, %v1375, 0.0
  %v1377 = vsel %vm135, %v1374, 0.0
  %v1378 = vsel %vm136, %v1373, 0.0
  %v1379 = vsel %vm137, %v1372, 0.0
  %1380 = vrot.lane.b32.xlu0 %v1360, 127
  %v1381 = vpop.permute.xlu0 %1380
  %1382 = vrot.lane.b32.xlu0 %v1361, 127
  %v1383 = vpop.permute.xlu0 %1382
  %1384 = vrot.lane.b32.xlu0 %v1362, 127
  %v1385 = vpop.permute.xlu0 %1384
  %1386 = vrot.lane.b32.xlu0 %v1363, 127
  %v1387 = vpop.permute.xlu0 %1386
  %v1388 = vsel %vm184, %v1385, %v1387
  %v1389 = vsel %vm184, %v1383, %v1385
  %v1390 = vsel %vm184, %v1381, %v1383
  %v1391 = vsel %vm184, %v1387, %v1381
  %v1392 = vsel %vm138, %v1390, 0.0
  %v1393 = vsel %vm139, %v1389, 0.0
  %v1394 = vsel %vm140, %v1388, 0.0
  %v1395 = vsel %vm141, %v1391, 0.0
  %v1396 = vld [vmem:[%s3] sm:$0xff]
  %1397 = vrot.lane.b32.xlu0 %v1340, 1
  %v1398 = vpop.permute.xlu0 %1397
  %1399 = vrot.lane.b32.xlu0 %v1341, 1
  %v1400 = vpop.permute.xlu0 %1399
  %1401 = vrot.lane.b32.xlu0 %v1342, 1
  %v1402 = vpop.permute.xlu0 %1401
  %1403 = vrot.lane.b32.xlu0 %v1343, 1
  %v1404 = vpop.permute.xlu0 %1403
  %v1405 = vsel %vm167, %v1402, %v1404
  %v1406 = vsel %vm167, %v1400, %v1402
  %v1407 = vsel %vm167, %v1398, %v1400
  %v1408 = vsel %vm167, %v1404, %v1398
  %v1409 = vsel %vm134, %v1408, 0.0
  %v1410 = vsel %vm135, %v1407, 0.0
  %v1411 = vsel %vm136, %v1406, 0.0
  %v1412 = vsel %vm137, %v1405, 0.0
  %1413 = vrot.lane.b32.xlu0 %v1340, 127
  %v1414 = vpop.permute.xlu0 %1413
  %1415 = vrot.lane.b32.xlu0 %v1341, 127
  %v1416 = vpop.permute.xlu0 %1415
  %1417 = vrot.lane.b32.xlu0 %v1342, 127
  %v1418 = vpop.permute.xlu0 %1417
  %1419 = vrot.lane.b32.xlu0 %v1343, 127
  %v1420 = vpop.permute.xlu0 %1419
  %v1421 = vsel %vm184, %v1418, %v1420
  %v1422 = vsel %vm184, %v1416, %v1418
  %v1423 = vsel %vm184, %v1414, %v1416
  %v1424 = vsel %vm184, %v1420, %v1414
  %v1425 = vsel %vm138, %v1423, 0.0
  %v1426 = vsel %vm139, %v1422, 0.0
  %v1427 = vsel %vm140, %v1421, 0.0
  %v1428 = vsel %vm141, %v1424, 0.0
  %s1429 = scalar_lea.vmem %s3, 8
  %v1430 = vld [vmem:[%s1429] sm:$0xff]
  %v1432 = vsel %vm228, %v1430, 0
  %1434 = vmatprep.subr.mxu0 %v1410
  %1435 = vmatpush1.msra.mxu0 %v1409
  %1436 = vmatprep.subr.mxu0 %v1341
  %1437 = vmatpush1.msra.mxu0 %v1340
  %1438 = vmatprep.subr.mxu0 %v1426
  %1439 = vmatpush1.msra.mxu0 %v1425
  %1440 = vmatprep.subr.mxu0 0.0
  %1441 = vmatpush1.msra.mxu0 0.0
  %1442 = vmatprep.subr.mxu0 0.0
  %1443 = vmatpush1.msra.mxu0 0.0
  %1444 = vmatprep.subr.mxu0 0.0
  %1445 = vmatpush1.msra.mxu0 0.0
  %1446 = vmatprep.subr.mxu0 0.0
  %1447 = vmatpush1.msra.mxu0 0.0
  %1448 = vmatprep.subr.mxu0 0.0
  %1449 = vmatpush1.msra.mxu0 0.0
  %1450 = vmatprep.subr.mxu0 0.0
  %1451 = vmatpush1.msra.mxu0 0.0
  %1452 = vmatprep.subr.mxu0 0.0
  %1453 = vmatpush1.msra.mxu0 0.0
  %1454 = vmatprep.subr.mxu0 0.0
  %1455 = vmatpush1.msra.mxu0 0.0
  %1456 = vmatprep.subr.mxu0 0.0
  %1457 = vmatpush1.msra.mxu0 0.0
  %1458 = vmatprep.subr.mxu0 0.0
  %1459 = vmatpush1.msra.mxu0 0.0
  %1460 = vmatprep.subr.mxu0 0.0
  %1461 = vmatpush1.msra.mxu0 0.0
  %1462 = vmatprep.subr.mxu0 0.0
  %1463 = vmatpush1.msra.mxu0 0.0
  %1464 = vmatprep.subr.mxu0 0.0
  %1465 = vmatpush1.msra.mxu0 0.0
  %1466 = vmatprep.subr.mxu0 0.0
  %1467 = vmatpush1.msra.mxu0 0.0
  %1468 = vmatprep.subr.mxu0 0.0
  %1469 = vmatpush1.msra.mxu0 0.0
  %1470 = vmatprep.subr.mxu0 0.0
  %1471 = vmatpush1.msra.mxu0 0.0
  %1472 = vmatprep.subr.mxu0 0.0
  %1473 = vmatpush1.msra.mxu0 0.0
  %1474 = vmatprep.subr.mxu0 0.0
  %1475 = vmatpush1.msra.mxu0 0.0
  %1476 = vmatprep.subr.mxu0 0.0
  %1477 = vmatpush1.msra.mxu0 0.0
  %1478 = vmatprep.subr.mxu0 0.0
  %1479 = vmatpush1.msra.mxu0 0.0
  %1480 = vmatprep.subr.mxu0 0.0
  %1481 = vmatpush1.msra.mxu0 0.0
  %1482 = vmatprep.subr.mxu0 0.0
  %1483 = vmatpush1.msra.mxu0 0.0
  %1484 = vmatprep.subr.mxu0 0.0
  %1485 = vmatpush1.msra.mxu0 0.0
  %1486 = vmatprep.subr.mxu0 0.0
  %1487 = vmatpush1.msra.mxu0 0.0
  %1488 = vmatprep.subr.mxu0 0.0
  %1489 = vmatpush1.msra.mxu0 0.0
  %1490 = vmatprep.subr.mxu0 0.0
  %1491 = vmatpush1.msra.mxu0 0.0
  %1492 = vmatprep.subr.mxu0 0.0
  %1493 = vmatpush1.msra.mxu0 0.0
  %1494 = vmatprep.subr.mxu0 0.0
  %1495 = vmatpush1.msra.mxu0 0.0
  %1496 = vmatprep.subr.mxu0 0.0
  %1497 = vmatpush1.msra.mxu0 0.0
  %1498 = vmatprep.mubr.f32.mxu0 0.0
  %1499 = vmatmul.mubr.f32.gmra.mrb[0].mxu0 %v1432
  %v1500 = vpop.f32.mrb[0].mxu0
  %v1501 = vadd.f32 0.0, %v1500
  %v1502 = vpop.f32.mrb[0].mxu0
  %v1503 = vadd.f32 0.0, %v1502
  %1504 = vdwg.mxu0
  %1505 = vmatprep.subr.mxu0 %v1412
  %1506 = vmatpush1.msra.mxu0 %v1411
  %1507 = vmatprep.subr.mxu0 %v1343
  %1508 = vmatpush1.msra.mxu0 %v1342
  %1509 = vmatprep.subr.mxu0 %v1428
  %1510 = vmatpush1.msra.mxu0 %v1427
  %1511 = vmatprep.subr.mxu0 0.0
  %1512 = vmatpush1.msra.mxu0 0.0
  %1513 = vmatprep.subr.mxu0 0.0
  %1514 = vmatpush1.msra.mxu0 0.0
  %1515 = vmatprep.subr.mxu0 0.0
  %1516 = vmatpush1.msra.mxu0 0.0
  %1517 = vmatprep.subr.mxu0 0.0
  %1518 = vmatpush1.msra.mxu0 0.0
  %1519 = vmatprep.subr.mxu0 0.0
  %1520 = vmatpush1.msra.mxu0 0.0
  %1521 = vmatprep.subr.mxu0 0.0
  %1522 = vmatpush1.msra.mxu0 0.0
  %1523 = vmatprep.subr.mxu0 0.0
  %1524 = vmatpush1.msra.mxu0 0.0
  %1525 = vmatprep.subr.mxu0 0.0
  %1526 = vmatpush1.msra.mxu0 0.0
  %1527 = vmatprep.subr.mxu0 0.0
  %1528 = vmatpush1.msra.mxu0 0.0
  %1529 = vmatprep.subr.mxu0 0.0
  %1530 = vmatpush1.msra.mxu0 0.0
  %1531 = vmatprep.subr.mxu0 0.0
  %1532 = vmatpush1.msra.mxu0 0.0
  %1533 = vmatprep.subr.mxu0 0.0
  %1534 = vmatpush1.msra.mxu0 0.0
  %1535 = vmatprep.subr.mxu0 0.0
  %1536 = vmatpush1.msra.mxu0 0.0
  %1537 = vmatprep.subr.mxu0 0.0
  %1538 = vmatpush1.msra.mxu0 0.0
  %1539 = vmatprep.subr.mxu0 0.0
  %1540 = vmatpush1.msra.mxu0 0.0
  %1541 = vmatprep.subr.mxu0 0.0
  %1542 = vmatpush1.msra.mxu0 0.0
  %1543 = vmatprep.subr.mxu0 0.0
  %1544 = vmatpush1.msra.mxu0 0.0
  %1545 = vmatprep.subr.mxu0 0.0
  %1546 = vmatpush1.msra.mxu0 0.0
  %1547 = vmatprep.subr.mxu0 0.0
  %1548 = vmatpush1.msra.mxu0 0.0
  %1549 = vmatprep.subr.mxu0 0.0
  %1550 = vmatpush1.msra.mxu0 0.0
  %1551 = vmatprep.subr.mxu0 0.0
  %1552 = vmatpush1.msra.mxu0 0.0
  %1553 = vmatprep.subr.mxu0 0.0
  %1554 = vmatpush1.msra.mxu0 0.0
  %1555 = vmatprep.subr.mxu0 0.0
  %1556 = vmatpush1.msra.mxu0 0.0
  %1557 = vmatprep.subr.mxu0 0.0
  %1558 = vmatpush1.msra.mxu0 0.0
  %1559 = vmatprep.subr.mxu0 0.0
  %1560 = vmatpush1.msra.mxu0 0.0
  %1561 = vmatprep.subr.mxu0 0.0
  %1562 = vmatpush1.msra.mxu0 0.0
  %1563 = vmatprep.subr.mxu0 0.0
  %1564 = vmatpush1.msra.mxu0 0.0
  %1565 = vmatprep.subr.mxu0 0.0
  %1566 = vmatpush1.msra.mxu0 0.0
  %1567 = vmatprep.subr.mxu0 0.0
  %1568 = vmatpush1.msra.mxu0 0.0
  %1569 = vmatprep.mubr.f32.mxu0 0.0
  %1570 = vmatmul.mubr.f32.gmra.mrb[0].mxu0 %v1432
  %v1571 = vpop.f32.mrb[0].mxu0
  %v1572 = vadd.f32 0.0, %v1571
  %v1573 = vpop.f32.mrb[0].mxu0
  %v1574 = vadd.f32 0.0, %v1573
  %1575 = vdwg.mxu0
  %v1577 = vsel %vm228, %v1396, 0
  %1579 = vmatprep.subr.mxu0 %v1377
  %1580 = vmatpush1.msra.mxu0 %v1376
  %1581 = vmatprep.subr.mxu0 %v1361
  %1582 = vmatpush1.msra.mxu0 %v1360
  %1583 = vmatprep.subr.mxu0 %v1393
  %1584 = vmatpush1.msra.mxu0 %v1392
  %1585 = vmatprep.subr.mxu0 0.0
  %1586 = vmatpush1.msra.mxu0 0.0
  %1587 = vmatprep.subr.mxu0 0.0
  %1588 = vmatpush1.msra.mxu0 0.0
  %1589 = vmatprep.subr.mxu0 0.0
  %1590 = vmatpush1.msra.mxu0 0.0
  %1591 = vmatprep.subr.mxu0 0.0
  %1592 = vmatpush1.msra.mxu0 0.0
  %1593 = vmatprep.subr.mxu0 0.0
  %1594 = vmatpush1.msra.mxu0 0.0
  %1595 = vmatprep.subr.mxu0 0.0
  %1596 = vmatpush1.msra.mxu0 0.0
  %1597 = vmatprep.subr.mxu0 0.0
  %1598 = vmatpush1.msra.mxu0 0.0
  %1599 = vmatprep.subr.mxu0 0.0
  %1600 = vmatpush1.msra.mxu0 0.0
  %1601 = vmatprep.subr.mxu0 0.0
  %1602 = vmatpush1.msra.mxu0 0.0
  %1603 = vmatprep.subr.mxu0 0.0
  %1604 = vmatpush1.msra.mxu0 0.0
  %1605 = vmatprep.subr.mxu0 0.0
  %1606 = vmatpush1.msra.mxu0 0.0
  %1607 = vmatprep.subr.mxu0 0.0
  %1608 = vmatpush1.msra.mxu0 0.0
  %1609 = vmatprep.subr.mxu0 0.0
  %1610 = vmatpush1.msra.mxu0 0.0
  %1611 = vmatprep.subr.mxu0 0.0
  %1612 = vmatpush1.msra.mxu0 0.0
  %1613 = vmatprep.subr.mxu0 0.0
  %1614 = vmatpush1.msra.mxu0 0.0
  %1615 = vmatprep.subr.mxu0 0.0
  %1616 = vmatpush1.msra.mxu0 0.0
  %1617 = vmatprep.subr.mxu0 0.0
  %1618 = vmatpush1.msra.mxu0 0.0
  %1619 = vmatprep.subr.mxu0 0.0
  %1620 = vmatpush1.msra.mxu0 0.0
  %1621 = vmatprep.subr.mxu0 0.0
  %1622 = vmatpush1.msra.mxu0 0.0
  %1623 = vmatprep.subr.mxu0 0.0
  %1624 = vmatpush1.msra.mxu0 0.0
  %1625 = vmatprep.subr.mxu0 0.0
  %1626 = vmatpush1.msra.mxu0 0.0
  %1627 = vmatprep.subr.mxu0 0.0
  %1628 = vmatpush1.msra.mxu0 0.0
  %1629 = vmatprep.subr.mxu0 0.0
  %1630 = vmatpush1.msra.mxu0 0.0
  %1631 = vmatprep.subr.mxu0 0.0
  %1632 = vmatpush1.msra.mxu0 0.0
  %1633 = vmatprep.subr.mxu0 0.0
  %1634 = vmatpush1.msra.mxu0 0.0
  %1635 = vmatprep.subr.mxu0 0.0
  %1636 = vmatpush1.msra.mxu0 0.0
  %1637 = vmatprep.subr.mxu0 0.0
  %1638 = vmatpush1.msra.mxu0 0.0
  %1639 = vmatprep.subr.mxu0 0.0
  %1640 = vmatpush1.msra.mxu0 0.0
  %1641 = vmatprep.subr.mxu0 0.0
  %1642 = vmatpush1.msra.mxu0 0.0
  %1643 = vmatprep.mubr.f32.mxu0 0.0
  %1644 = vmatmul.mubr.f32.gmra.mrb[0].mxu0 %v1577
  %v1645 = vpop.f32.mrb[0].mxu0
  %v1646 = vadd.f32 %v1501, %v1645
  %v1647 = vpop.f32.mrb[0].mxu0
  %v1648 = vadd.f32 %v1503, %v1647
  %1649 = vdwg.mxu0
  %1650 = vmatprep.subr.mxu0 %v1379
  %1651 = vmatpush1.msra.mxu0 %v1378
  %1652 = vmatprep.subr.mxu0 %v1363
  %1653 = vmatpush1.msra.mxu0 %v1362
  %1654 = vmatprep.subr.mxu0 %v1395
  %1655 = vmatpush1.msra.mxu0 %v1394
  %1656 = vmatprep.subr.mxu0 0.0
  %1657 = vmatpush1.msra.mxu0 0.0
  %1658 = vmatprep.subr.mxu0 0.0
  %1659 = vmatpush1.msra.mxu0 0.0
  %1660 = vmatprep.subr.mxu0 0.0
  %1661 = vmatpush1.msra.mxu0 0.0
  %1662 = vmatprep.subr.mxu0 0.0
  %1663 = vmatpush1.msra.mxu0 0.0
  %1664 = vmatprep.subr.mxu0 0.0
  %1665 = vmatpush1.msra.mxu0 0.0
  %1666 = vmatprep.subr.mxu0 0.0
  %1667 = vmatpush1.msra.mxu0 0.0
  %1668 = vmatprep.subr.mxu0 0.0
  %1669 = vmatpush1.msra.mxu0 0.0
  %1670 = vmatprep.subr.mxu0 0.0
  %1671 = vmatpush1.msra.mxu0 0.0
  %1672 = vmatprep.subr.mxu0 0.0
  %1673 = vmatpush1.msra.mxu0 0.0
  %1674 = vmatprep.subr.mxu0 0.0
  %1675 = vmatpush1.msra.mxu0 0.0
  %1676 = vmatprep.subr.mxu0 0.0
  %1677 = vmatpush1.msra.mxu0 0.0
  %1678 = vmatprep.subr.mxu0 0.0
  %1679 = vmatpush1.msra.mxu0 0.0
  %1680 = vmatprep.subr.mxu0 0.0
  %1681 = vmatpush1.msra.mxu0 0.0
  %1682 = vmatprep.subr.mxu0 0.0
  %1683 = vmatpush1.msra.mxu0 0.0
  %1684 = vmatprep.subr.mxu0 0.0
  %1685 = vmatpush1.msra.mxu0 0.0
  %1686 = vmatprep.subr.mxu0 0.0
  %1687 = vmatpush1.msra.mxu0 0.0
  %1688 = vmatprep.subr.mxu0 0.0
  %1689 = vmatpush1.msra.mxu0 0.0
  %1690 = vmatprep.subr.mxu0 0.0
  %1691 = vmatpush1.msra.mxu0 0.0
  %1692 = vmatprep.subr.mxu0 0.0
  %1693 = vmatpush1.msra.mxu0 0.0
  %1694 = vmatprep.subr.mxu0 0.0
  %1695 = vmatpush1.msra.mxu0 0.0
  %1696 = vmatprep.subr.mxu0 0.0
  %1697 = vmatpush1.msra.mxu0 0.0
  %1698 = vmatprep.subr.mxu0 0.0
  %1699 = vmatpush1.msra.mxu0 0.0
  %1700 = vmatprep.subr.mxu0 0.0
  %1701 = vmatpush1.msra.mxu0 0.0
  %1702 = vmatprep.subr.mxu0 0.0
  %1703 = vmatpush1.msra.mxu0 0.0
  %1704 = vmatprep.subr.mxu0 0.0
  %1705 = vmatpush1.msra.mxu0 0.0
  %1706 = vmatprep.subr.mxu0 0.0
  %1707 = vmatpush1.msra.mxu0 0.0
  %1708 = vmatprep.subr.mxu0 0.0
  %1709 = vmatpush1.msra.mxu0 0.0
  %1710 = vmatprep.subr.mxu0 0.0
  %1711 = vmatpush1.msra.mxu0 0.0
  %1712 = vmatprep.subr.mxu0 0.0
  %1713 = vmatpush1.msra.mxu0 0.0
  %1714 = vmatprep.mubr.f32.mxu0 0.0
  %1715 = vmatmul.mubr.f32.gmra.mrb[0].mxu0 %v1577
  %v1716 = vpop.f32.mrb[0].mxu0
  %v1717 = vadd.f32 %v1572, %v1716
  %v1718 = vpop.f32.mrb[0].mxu0
  %v1719 = vadd.f32 %v1574, %v1718
  %1720 = vdwg.mxu0
  %1721 = vrot.lane.b32.xlu0 %v1340, 112
  %v1722 = vpop.permute.xlu0 %1721
  %1723 = vrot.lane.b32.xlu0 %v1341, 112
  %v1724 = vpop.permute.xlu0 %1723
  %1725 = vrot.lane.b32.xlu0 %v1342, 112
  %v1726 = vpop.permute.xlu0 %1725
  %1727 = vrot.lane.b32.xlu0 %v1343, 112
  %v1728 = vpop.permute.xlu0 %1727
  %v1729 = vsel %vm527, %v1726, %v1728
  %v1730 = vsel %vm527, %v1724, %v1726
  %v1731 = vsel %vm527, %v1722, %v1724
  %v1732 = vsel %vm527, %v1728, %v1722
  %v1733 = vsel %vm130, %v1731, 0.0
  %v1734 = vsel %vm131, %v1730, 0.0
  %v1735 = vsel %vm132, %v1729, 0.0
  %v1736 = vsel %vm133, %v1732, 0.0
  %1737 = vrot.lane.b32.xlu0 %v1733, 1
  %v1738 = vpop.permute.xlu0 %1737
  %1739 = vrot.lane.b32.xlu0 %v1734, 1
  %v1740 = vpop.permute.xlu0 %1739
  %1741 = vrot.lane.b32.xlu0 %v1735, 1
  %v1742 = vpop.permute.xlu0 %1741
  %1743 = vrot.lane.b32.xlu0 %v1736, 1
  %v1744 = vpop.permute.xlu0 %1743
  %v1745 = vsel %vm167, %v1742, %v1744
  %v1746 = vsel %vm167, %v1740, %v1742
  %v1747 = vsel %vm167, %v1738, %v1740
  %v1748 = vsel %vm167, %v1744, %v1738
  %v1749 = vsel %vm134, %v1748, 0.0
  %v1750 = vsel %vm135, %v1747, 0.0
  %v1751 = vsel %vm136, %v1746, 0.0
  %v1752 = vsel %vm137, %v1745, 0.0
  %1753 = vrot.lane.b32.xlu0 %v1733, 127
  %v1754 = vpop.permute.xlu0 %1753
  %1755 = vrot.lane.b32.xlu0 %v1734, 127
  %v1756 = vpop.permute.xlu0 %1755
  %1757 = vrot.lane.b32.xlu0 %v1735, 127
  %v1758 = vpop.permute.xlu0 %1757
  %1759 = vrot.lane.b32.xlu0 %v1736, 127
  %v1760 = vpop.permute.xlu0 %1759
  %v1761 = vsel %vm184, %v1758, %v1760
  %v1762 = vsel %vm184, %v1756, %v1758
  %v1763 = vsel %vm184, %v1754, %v1756
  %v1764 = vsel %vm184, %v1760, %v1754
  %v1765 = vsel %vm138, %v1763, 0.0
  %v1766 = vsel %vm139, %v1762, 0.0
  %v1767 = vsel %vm140, %v1761, 0.0
  %v1768 = vsel %vm141, %v1764, 0.0
  %s1769 = scalar_lea.vmem %s3, 16
  %v1770 = vld [vmem:[%s1769] sm:$0xff]
  %v1772 = vsel %vm228, %v1770, 0
  %1774 = vmatprep.subr.mxu0 %v1750
  %1775 = vmatpush1.msra.mxu0 %v1749
  %1776 = vmatprep.subr.mxu0 %v1734
  %1777 = vmatpush1.msra.mxu0 %v1733
  %1778 = vmatprep.subr.mxu0 %v1766
  %1779 = vmatpush1.msra.mxu0 %v1765
  %1780 = vmatprep.subr.mxu0 0.0
  %1781 = vmatpush1.msra.mxu0 0.0
  %1782 = vmatprep.subr.mxu0 0.0
  %1783 = vmatpush1.msra.mxu0 0.0
  %1784 = vmatprep.subr.mxu0 0.0
  %1785 = vmatpush1.msra.mxu0 0.0
  %1786 = vmatprep.subr.mxu0 0.0
  %1787 = vmatpush1.msra.mxu0 0.0
  %1788 = vmatprep.subr.mxu0 0.0
  %1789 = vmatpush1.msra.mxu0 0.0
  %1790 = vmatprep.subr.mxu0 0.0
  %1791 = vmatpush1.msra.mxu0 0.0
  %1792 = vmatprep.subr.mxu0 0.0
  %1793 = vmatpush1.msra.mxu0 0.0
  %1794 = vmatprep.subr.mxu0 0.0
  %1795 = vmatpush1.msra.mxu0 0.0
  %1796 = vmatprep.subr.mxu0 0.0
  %1797 = vmatpush1.msra.mxu0 0.0
  %1798 = vmatprep.subr.mxu0 0.0
  %1799 = vmatpush1.msra.mxu0 0.0
  %1800 = vmatprep.subr.mxu0 0.0
  %1801 = vmatpush1.msra.mxu0 0.0
  %1802 = vmatprep.subr.mxu0 0.0
  %1803 = vmatpush1.msra.mxu0 0.0
  %1804 = vmatprep.subr.mxu0 0.0
  %1805 = vmatpush1.msra.mxu0 0.0
  %1806 = vmatprep.subr.mxu0 0.0
  %1807 = vmatpush1.msra.mxu0 0.0
  %1808 = vmatprep.subr.mxu0 0.0
  %1809 = vmatpush1.msra.mxu0 0.0
  %1810 = vmatprep.subr.mxu0 0.0
  %1811 = vmatpush1.msra.mxu0 0.0
  %1812 = vmatprep.subr.mxu0 0.0
  %1813 = vmatpush1.msra.mxu0 0.0
  %1814 = vmatprep.subr.mxu0 0.0
  %1815 = vmatpush1.msra.mxu0 0.0
  %1816 = vmatprep.subr.mxu0 0.0
  %1817 = vmatpush1.msra.mxu0 0.0
  %1818 = vmatprep.subr.mxu0 0.0
  %1819 = vmatpush1.msra.mxu0 0.0
  %1820 = vmatprep.subr.mxu0 0.0
  %1821 = vmatpush1.msra.mxu0 0.0
  %1822 = vmatprep.subr.mxu0 0.0
  %1823 = vmatpush1.msra.mxu0 0.0
  %1824 = vmatprep.subr.mxu0 0.0
  %1825 = vmatpush1.msra.mxu0 0.0
  %1826 = vmatprep.subr.mxu0 0.0
  %1827 = vmatpush1.msra.mxu0 0.0
  %1828 = vmatprep.subr.mxu0 0.0
  %1829 = vmatpush1.msra.mxu0 0.0
  %1830 = vmatprep.subr.mxu0 0.0
  %1831 = vmatpush1.msra.mxu0 0.0
  %1832 = vmatprep.subr.mxu0 0.0
  %1833 = vmatpush1.msra.mxu0 0.0
  %1834 = vmatprep.subr.mxu0 0.0
  %1835 = vmatpush1.msra.mxu0 0.0
  %1836 = vmatprep.subr.mxu0 0.0
  %1837 = vmatpush1.msra.mxu0 0.0
  %1838 = vmatprep.mubr.f32.mxu0 0.0
  %1839 = vmatmul.mubr.f32.gmra.mrb[0].mxu0 %v1772
  %v1840 = vpop.f32.mrb[0].mxu0
  %v1841 = vadd.f32 0.0, %v1840
  %v1842 = vpop.f32.mrb[0].mxu0
  %v1843 = vadd.f32 0.0, %v1842
  %1844 = vdwg.mxu0
  %1845 = vmatprep.subr.mxu0 %v1752
  %1846 = vmatpush1.msra.mxu0 %v1751
  %1847 = vmatprep.subr.mxu0 %v1736
  %1848 = vmatpush1.msra.mxu0 %v1735
  %1849 = vmatprep.subr.mxu0 %v1768
  %1850 = vmatpush1.msra.mxu0 %v1767
  %1851 = vmatprep.subr.mxu0 0.0
  %1852 = vmatpush1.msra.mxu0 0.0
  %1853 = vmatprep.subr.mxu0 0.0
  %1854 = vmatpush1.msra.mxu0 0.0
  %1855 = vmatprep.subr.mxu0 0.0
  %1856 = vmatpush1.msra.mxu0 0.0
  %1857 = vmatprep.subr.mxu0 0.0
  %1858 = vmatpush1.msra.mxu0 0.0
  %1859 = vmatprep.subr.mxu0 0.0
  %1860 = vmatpush1.msra.mxu0 0.0
  %1861 = vmatprep.subr.mxu0 0.0
  %1862 = vmatpush1.msra.mxu0 0.0
  %1863 = vmatprep.subr.mxu0 0.0
  %1864 = vmatpush1.msra.mxu0 0.0
  %1865 = vmatprep.subr.mxu0 0.0
  %1866 = vmatpush1.msra.mxu0 0.0
  %1867 = vmatprep.subr.mxu0 0.0
  %1868 = vmatpush1.msra.mxu0 0.0
  %1869 = vmatprep.subr.mxu0 0.0
  %1870 = vmatpush1.msra.mxu0 0.0
  %1871 = vmatprep.subr.mxu0 0.0
  %1872 = vmatpush1.msra.mxu0 0.0
  %1873 = vmatprep.subr.mxu0 0.0
  %1874 = vmatpush1.msra.mxu0 0.0
  %1875 = vmatprep.subr.mxu0 0.0
  %1876 = vmatpush1.msra.mxu0 0.0
  %1877 = vmatprep.subr.mxu0 0.0
  %1878 = vmatpush1.msra.mxu0 0.0
  %1879 = vmatprep.subr.mxu0 0.0
  %1880 = vmatpush1.msra.mxu0 0.0
  %1881 = vmatprep.subr.mxu0 0.0
  %1882 = vmatpush1.msra.mxu0 0.0
  %1883 = vmatprep.subr.mxu0 0.0
  %1884 = vmatpush1.msra.mxu0 0.0
  %1885 = vmatprep.subr.mxu0 0.0
  %1886 = vmatpush1.msra.mxu0 0.0
  %1887 = vmatprep.subr.mxu0 0.0
  %1888 = vmatpush1.msra.mxu0 0.0
  %1889 = vmatprep.subr.mxu0 0.0
  %1890 = vmatpush1.msra.mxu0 0.0
  %1891 = vmatprep.subr.mxu0 0.0
  %1892 = vmatpush1.msra.mxu0 0.0
  %1893 = vmatprep.subr.mxu0 0.0
  %1894 = vmatpush1.msra.mxu0 0.0
  %1895 = vmatprep.subr.mxu0 0.0
  %1896 = vmatpush1.msra.mxu0 0.0
  %1897 = vmatprep.subr.mxu0 0.0
  %1898 = vmatpush1.msra.mxu0 0.0
  %1899 = vmatprep.subr.mxu0 0.0
  %1900 = vmatpush1.msra.mxu0 0.0
  %1901 = vmatprep.subr.mxu0 0.0
  %1902 = vmatpush1.msra.mxu0 0.0
  %1903 = vmatprep.subr.mxu0 0.0
  %1904 = vmatpush1.msra.mxu0 0.0
  %1905 = vmatprep.subr.mxu0 0.0
  %1906 = vmatpush1.msra.mxu0 0.0
  %1907 = vmatprep.subr.mxu0 0.0
  %1908 = vmatpush1.msra.mxu0 0.0
  %1909 = vmatprep.mubr.f32.mxu0 0.0
  %1910 = vmatmul.mubr.f32.gmra.mrb[0].mxu0 %v1772
  %v1911 = vpop.f32.mrb[0].mxu0
  %v1912 = vadd.f32 0.0, %v1911
  %v1913 = vpop.f32.mrb[0].mxu0
  %v1914 = vadd.f32 0.0, %v1913
  %1915 = vdwg.mxu0
  %v1916 = vadd.f32 %v1646, %v1841
  %v1917 = vadd.f32 %v1648, %v1843
  %v1918 = vadd.f32 %v1717, %v1912
  %v1919 = vadd.f32 %v1719, %v1914
  %1920 = vset.pattern.permute.xlu0 4
  %1921 = vperm.xlu0 %1920, %v20
  %v1922 = vpop.permute.xlu0 %1921
  %v1924 = vadd.f32 %v1916, %v1922
  %v1925 = vadd.f32 %v1917, %v1922
  %v1926 = vadd.f32 %v1918, %v1922
  %v1927 = vadd.f32 %v1919, %v1922
  %vm1928 = vcmp.ge.f32.partialorder %v1924, 0.0
  %vm1929 = vcmp.ge.f32.partialorder %v1925, 0.0
  %vm1930 = vcmp.ge.f32.partialorder %v1926, 0.0
  %vm1931 = vcmp.ge.f32.partialorder %v1927, 0.0
  %1932 = vset.pattern.permute.xlu0 5
  %1933 = vperm.xlu0 %1932, %v20
  %v1934 = vpop.permute.xlu0 %1933
  %v1936 = vmul.f32 %v1934, %v1924
  %v1937 = vmul.f32 %v1934, %v1925
  %v1938 = vmul.f32 %v1934, %v1926
  %v1939 = vmul.f32 %v1934, %v1927
  %v1940 = vsel %vm1928, %v1924, %v1936
  %v1941 = vsel %vm1929, %v1925, %v1937
  %v1942 = vsel %vm1930, %v1926, %v1938
  %v1943 = vsel %vm1931, %v1927, %v1939
  %1944 = vst [vmem:[%s5 + $0x40] sm:$0xff] %v1940
  %1945 = vst [vmem:[%s5 + $0x48] sm:$0xff] %v1941
  %1946 = vst [vmem:[%s5 + $0x50] sm:$0xff] %v1942
  %1947 = vst [vmem:[%s5 + $0x58] sm:$0xff] %v1943
  // Predicated region
  $region22: #{res_conv_block.1} parent=0 // pred_check
    _
  $region23: #{res_conv_block.1} parent=0 // pred_check_branch
    %1949 = sbr.rel (0) target = $region25
  $region24: #{res_conv_block.1} parent=0 // pred_region
    _
  $region25: #{res_conv_block.1} parent=0 // pred_fallthru
    _
  // Predicated region
  $region26: #{res_conv_block.1} parent=0 // pred_check
    _
  $region27: #{res_conv_block.1} parent=0 // pred_check_branch
    %1951 = sbr.rel (0) target = $region29
  $region28: #{res_conv_block.1} parent=0 // pred_region
    _
  $region29: #{res_conv_block.1} parent=0 // pred_fallthru
    _

</llo_original>
